<compile_context>
chip_gen: v5e
topology: v5e:2x2
jax: 0.10.0
libtpu: 0.0.40
codegen_flags: <defaults>
</compile_context>

<pallas_src>
import jax
import jax.numpy as jnp
from jax.experimental import pallas as pl
from jax.experimental.pallas import tpu as pltpu

# ---------------- config (mirrors the PyTorch module's config) --------------
FEATURE_DIM = 12
EMBEDDING_DIM = 32          # GRU hidden = EMBEDDING_DIM // 2 (bidirectional)
N_LAYER = 2
SEQ_FEATURE_N = 8
DROPOUT_RATE = 0.1          # identity at inference
HIDDEN = EMBEDDING_DIM // 2

BATCH = 2
SEQ_LEN = 8

GP = 128                    # padded combined-gate width (6*HIDDEN = 96 -> 128 lanes)
LW = 2 * GP                 # wih slab width: [fwd-placed half | bwd-placed half]


# ------------------- packed weight-slab layout (one DMA) ---------------------
def _align8(x):
    return (x + 7) & ~7


def _build_w_layout():
    layout = {}
    off = 0

    def add(name, rows, cols):
        nonlocal off
        layout[name] = (off, rows, cols)
        off = _align8(off + rows)

    add("in_fc_w", FEATURE_DIM, 2 * N_LAYER * HIDDEN)
    add("in_fc_b", 1, 2 * N_LAYER * HIDDEN)
    add("out_fc_w", 2 * N_LAYER * HIDDEN, EMBEDDING_DIM)
    add("out_fc_b", 1, EMBEDDING_DIM)
    for l in range(N_LAYER):
        in_dim = SEQ_FEATURE_N if l == 0 else 2 * HIDDEN
        add(f"wih{l}", in_dim, LW)
        add(f"bi{l}", 1, LW)
        add(f"whh{l}", 2 * HIDDEN, GP)
        add(f"bh{l}", 1, GP)
    return layout, off


_W_LAYOUT, _W_ROWS = _build_w_layout()


# ----------------------------- fused Pallas kernel --------------------------
def env_analyzer_kernel(feat_ref, x0_ref, w_ref, o_ref, x1_ref):
    # feat_ref [B, FEATURE_DIM]
    # x0_ref   [B*T, SEQ_FEATURE_N]   batch-major rows (b*T + t), free reshape of seq
    # w_ref    [_W_ROWS, LW]          packed weight slab (see _W_LAYOUT)
    # o_ref    [B, EMBEDDING_DIM]     output
    # x1_ref   [T*B, 2H]              VMEM scratch: next-layer input, time-major rows
    H = HIDDEN
    T = SEQ_LEN
    B = feat_ref.shape[0]

    def wblk(name):
        r0, nr, nc = _W_LAYOUT[name]
        return w_ref[r0:r0 + nr, 0:nc]        # static, 8-row-aligned slices

    # ---- in_fc + ReLU : h0 for every (layer, direction) ----
    h0_all = jnp.maximum(
        jnp.dot(feat_ref[...], wblk("in_fc_w"),
                preferred_element_type=jnp.float32) + wblk("in_fc_b"), 0.0)  # [B, 2L*H]
    # column slot i = 2*layer + dir, so the combined h0 of layer l is the
    # contiguous lane slice [2l*H : (2l+2)*H] = [h0_fwd | h0_bwd].

    def gru_cell(gi, gh, h):
        # Combined-gate layout along lanes: [r_f r_b | z_f z_b | n_f n_b | pad]
        rz = jax.nn.sigmoid(gi[:, 0:4 * H] + gh[:, 0:4 * H])
        r = rz[:, 0:2 * H]
        z = rz[:, 2 * H:4 * H]
        n = jnp.tanh(gi[:, 4 * H:6 * H] + r * gh[:, 4 * H:6 * H])
        return n + z * (h - n)                # == (1-z)*n + z*h

    h_finals = []
    for l in range(N_LAYER):
        wih = wblk(f"wih{l}")                                  # [I_l, LW]
        bi = wblk(f"bi{l}")                                    # [1, LW]
        whh = wblk(f"whh{l}")                                  # [2H, GP]
        bh = jnp.broadcast_to(wblk(f"bh{l}"), (B, GP))         # hoisted broadcast

        # ---- hoisted input->hidden matmul for BOTH directions at once ----
        if l == 0:
            x = x0_ref[...]        # [B*T, F]  batch-major rows (b*T + t)
        else:
            x = x1_ref[...]        # [T*B, 2H] time-major rows (t*B + b)
        gi_all = jnp.dot(x, wih, preferred_element_type=jnp.float32) + bi   # [.., LW]

        # ---- hoisted per-step gi slabs (off the recurrent chain) ----
        # lanes 0:GP  = fwd gates at fwd positions (bwd positions zeroed)
        # lanes GP:LW = bwd gates at bwd positions (fwd positions zeroed)
        gi_steps = []
        for s in range(T):
            tf, tb = s, T - 1 - s
            if l == 0:
                gf = jnp.concatenate(
                    [gi_all[b * T + tf:b * T + tf + 1, 0:GP] for b in range(B)], axis=0)
                gb = jnp.concatenate(
                    [gi_all[b * T + tb:b * T + tb + 1, GP:LW] for b in range(B)], axis=0)
            else:
                gf = gi_all[tf * B:(tf + 1) * B, 0:GP]
                gb = gi_all[tb * B:(tb + 1) * B, GP:LW]
            gi_steps.append(gf + gb)                           # [B, GP] combined gates

        # ---- fused fwd/bwd recurrence with combined [B, 2H] state ----
        h = h0_all[:, (2 * l) * H:(2 * l + 2) * H]             # [B, 2H] = [h_f | h_b]
        write_next = l < N_LAYER - 1
        for s in range(T):                                     # static unroll, T = 8
            gh = jnp.dot(h, whh, preferred_element_type=jnp.float32) + bh   # [B, GP]
            h = gru_cell(gi_steps[s], gh, h)
            if write_next:
                # layer-(l+1) input at time t: [out_f(t) | out_b(t)]
                x1_ref[s * B:(s + 1) * B, 0:H] = h[:, 0:H]                 # fwd @ t=s
                x1_ref[(T - 1 - s) * B:(T - s) * B, H:2 * H] = h[:, H:2 * H]  # bwd @ t=T-1-s
        h_finals.append(h)     # after last step h = [h_f_final | h_b_final]

    # PyTorch h_n ordering (layer*2 + dir), transpose(0,1).view(B,-1)
    # == per-batch-row lane concat [l0_f, l0_b, l1_f, l1_b].
    hidden_cat = jnp.concatenate(h_finals, axis=-1)            # [B, 2L*H]

    out = jnp.maximum(
        jnp.dot(hidden_cat, wblk("out_fc_w"), preferred_element_type=jnp.float32)
        + wblk("out_fc_b"), 0.0)
    o_ref[...] = out.astype(o_ref.dtype)
    # TODO(synk): inter-layer GRU dropout and post-FC dropout are training-only;
    # omitted on this inference path.


# ----------------------------- forward wrapper -------------------------------
def _forward_impl(w_slab, feat, seq):
    B, T, F = seq.shape
    # Free (contiguous) reshape only — no transpose HLO; kernel handles the
    # batch-major row ordering in the hoisted gi extraction.
    x0 = seq.reshape(B * T, F)
    return pl.pallas_call(
        env_analyzer_kernel,
        out_shape=jax.ShapeDtypeStruct((B, EMBEDDING_DIM), jnp.float32),
        in_specs=[pl.BlockSpec(memory_space=pltpu.MemorySpace.VMEM)] * 3,
        out_specs=pl.BlockSpec(memory_space=pltpu.MemorySpace.VMEM),
        scratch_shapes=[pltpu.VMEM((T * B, 2 * HIDDEN), jnp.float32)],
    )(feat, x0, w_slab)
    # No grid / multi-buffering on purpose: the fused working set is ~250 KiB,
    # far under VMEM on v5e/v6e/v7x; the kernel is latency/overhead bound.


env_analyzer_forward = jax.jit(_forward_impl)


# ------------------ kernel-layout weight preparation -------------------------
def prepare_kernel_params(params):
    """Pack all weights into one pre-padded, gate-reordered VMEM slab."""
    H = HIDDEN
    W = jnp.zeros((_W_ROWS, LW), jnp.float32)

    def put(W, name, arr):
        r0, nr, nc = _W_LAYOUT[name]
        assert arr.shape == (nr, nc), (name, arr.shape, (nr, nc))
        return W.at[r0:r0 + nr, 0:nc].set(arr.astype(jnp.float32))

    W = put(W, "in_fc_w", params["in_fc_w"])
    W = put(W, "in_fc_b", params["in_fc_b"])
    W = put(W, "out_fc_w", params["out_fc_w"])
    W = put(W, "out_fc_b", params["out_fc_b"])

    for l in range(N_LAYER):
        pf, pb = params["gru"][l]["fwd"], params["gru"][l]["bwd"]
        in_dim = pf["wih"].shape[0]

        wih_big = jnp.zeros((in_dim, LW), jnp.float32)
        bi_big = jnp.zeros((1, LW), jnp.float32)
        whh_c = jnp.zeros((2 * H, GP), jnp.float32)
        bh_c = jnp.zeros((1, GP), jnp.float32)

        bif, bib = pf["b"][0:1], pb["b"][0:1]     # bias_ih  [1, 3H]
        bhf, bhb = pf["b"][1:2], pb["b"][1:2]     # bias_hh  [1, 3H]

        # combined-gate column layout: gate g -> fwd @ [2gH:(2g+1)H], bwd @ [(2g+1)H:(2g+2)H]
        for g in range(3):  # 0=r, 1=z, 2=n
            fcol = 2 * g * H
            bcol = (2 * g + 1) * H
            src = slice(g * H, (g + 1) * H)
            # fwd gates -> first GP half of the wih/bi slab (bwd positions stay 0)
            wih_big = wih_big.at[:, fcol:fcol + H].set(pf["wih"][:, src])
            bi_big = bi_big.at[:, fcol:fcol + H].set(bif[:, src])
            # bwd gates -> second GP half (fwd positions stay 0)
            wih_big = wih_big.at[:, GP + bcol:GP + bcol + H].set(pb["wih"][:, src])
            bi_big = bi_big.at[:, GP + bcol:GP + bcol + H].set(bib[:, src])
            # hidden->hidden: block-diagonal per direction
            whh_c = whh_c.at[0:H, fcol:fcol + H].set(pf["whh"][:, src])
            whh_c = whh_c.at[H:2 * H, bcol:bcol + H].set(pb["whh"][:, src])
            bh_c = bh_c.at[:, fcol:fcol + H].set(bhf[:, src])
            bh_c = bh_c.at[:, bcol:bcol + H].set(bhb[:, src])

        W = put(W, f"wih{l}", wih_big)
        W = put(W, f"bi{l}", bi_big)
        W = put(W, f"whh{l}", whh_c)
        W = put(W, f"bh{l}", bh_c)

    return W


# -------------------------- pure-JAX reference ------------------------------
def _ref_gru_dir(x_tm, h0, wih, whh, b):
    H = h0.shape[1]
    bi, bh = b[0], b[1]

    def step(h, x_t):
        gi = x_t @ wih + bi
        gh = h @ whh + bh
        r = jax.nn.sigmoid(gi[:, :H] + gh[:, :H])
        z = jax.nn.sigmoid(gi[:, H:2 * H] + gh[:, H:2 * H])
        n = jnp.tanh(gi[:, 2 * H:] + r * gh[:, 2 * H:])
        h_new = (1.0 - z) * n + z * h
        return h_new, h_new

    hT, out = jax.lax.scan(step, h0, x_tm)
    return out, hT


def ref_forward(params, feat, seq):
    B = feat.shape[0]
    lin = lambda x, w, b: jax.nn.relu(x @ w + b)
    h0_all = lin(feat, params["in_fc_w"], params["in_fc_b"]).reshape(B, 2 * N_LAYER, HIDDEN)
    x = jnp.transpose(seq, (1, 0, 2))
    h_finals = []
    for l in range(N_LAYER):
        pf, pb = params["gru"][l]["fwd"], params["gru"][l]["bwd"]
        out_f, hT_f = _ref_gru_dir(x, h0_all[:, 2 * l, :], pf["wih"], pf["whh"], pf["b"])
        out_b_r, hT_b = _ref_gru_dir(jnp.flip(x, 0), h0_all[:, 2 * l + 1, :],
                                     pb["wih"], pb["whh"], pb["b"])
        x = jnp.concatenate([out_f, jnp.flip(out_b_r, 0)], axis=-1)
        h_finals += [hT_f, hT_b]
    h_n = jnp.stack(h_finals, 0)
    hid = jnp.transpose(h_n, (1, 0, 2)).reshape(B, -1)
    return lin(hid, params["out_fc_w"], params["out_fc_b"])


# ----------------------------- parameter init -------------------------------
def init_params(seed=0):
    key = jax.random.PRNGKey(seed)

    def rand(shape, scale=0.1):
        nonlocal key
        key, sub = jax.random.split(key)
        return scale * jax.random.normal(sub, shape, dtype=jnp.float32)

    params = {
        "in_fc_w": rand((FEATURE_DIM, EMBEDDING_DIM * N_LAYER)),
        "in_fc_b": rand((1, EMBEDDING_DIM * N_LAYER)),
        "out_fc_w": rand((EMBEDDING_DIM * N_LAYER, EMBEDDING_DIM)),
        "out_fc_b": rand((1, EMBEDDING_DIM)),
        "gru": [],
    }
    for l in range(N_LAYER):
        in_dim = SEQ_FEATURE_N if l == 0 else 2 * HIDDEN
        layer = {}
        for d in ("fwd", "bwd"):
            layer[d] = {
                "wih": rand((in_dim, 3 * HIDDEN)),   # == weight_ih_l{l}(_reverse).T
                "whh": rand((HIDDEN, 3 * HIDDEN)),   # == weight_hh_l{l}(_reverse).T
                "b":   rand((2, 3 * HIDDEN)),        # row0=bias_ih, row1=bias_hh
            }
        params["gru"].append(layer)
    return params


if __name__ == "__main__":
    params = init_params(0)
    w_slab = prepare_kernel_params(params)

    kf, ks = jax.random.split(jax.random.PRNGKey(0))
    feat = jax.random.normal(kf, (BATCH, FEATURE_DIM), dtype=jnp.float32)
    seq = jax.random.normal(ks, (BATCH, SEQ_LEN, SEQ_FEATURE_N), dtype=jnp.float32)

    out = env_analyzer_forward(w_slab, feat, seq)
    out = jax.block_until_ready(out)
    assert out.shape == (BATCH, EMBEDDING_DIM), out.shape

    ref = jax.block_until_ready(ref_forward(params, feat, seq))
    err = float(jnp.max(jnp.abs(out - ref)))
    assert jnp.allclose(out, ref, atol=1e-4, rtol=1e-4), f"max abs err {err}"

    print("KERNEL_OK")
</pallas_src>

<mosaic_0001>
module attributes {stable_mosaic.version = 11 : i64} {
  func.func @env_analyzer_kernel(%arg0: memref<2x12xf32, #tpu.memory_space<vmem>>, %arg1: memref<16x8xf32, #tpu.memory_space<vmem>>, %arg2: memref<232x256xf32, #tpu.memory_space<vmem>>, %arg3: memref<2x32xf32, #tpu.memory_space<vmem>>, %arg4: memref<16x32xf32, #tpu.memory_space<vmem>>) attributes {dimension_semantics = [], scalar_prefetch = 0 : i64, scratch_operands = 1 : i64, tpu.core_type = #tpu.core_type<tc>} {
    %c0 = arith.constant 0 : index
    %c0_0 = arith.constant 0 : index
    %0 = vector.load %arg0[%c0, %c0_0] : memref<2x12xf32, #tpu.memory_space<vmem>>, vector<2x12xf32>
    %c0_1 = arith.constant 0 : index
    %c0_2 = arith.constant 0 : index
    %1 = vector.load %arg2[%c0_1, %c0_2] : memref<232x256xf32, #tpu.memory_space<vmem>>, vector<12x64xf32>
    %cst = arith.constant dense<0.000000e+00> : vector<2x64xf32>
    %2 = tpu.matmul %0, %1, %cst {dimension_numbers = #tpu.dot_dimension_numbers<[1], [0], [0], [1], [0, 0, 1, 1], [], []>} : vector<2x12xf32>, vector<12x64xf32>, vector<2x64xf32> -> vector<2x64xf32>
    %c16 = arith.constant 16 : index
    %c0_3 = arith.constant 0 : index
    %3 = vector.load %arg2[%c16, %c0_3] : memref<232x256xf32, #tpu.memory_space<vmem>>, vector<1x64xf32>
    %4 = vector.broadcast %3 : vector<1x64xf32> to vector<2x64xf32>
    %5 = arith.addf %2, %4 : vector<2x64xf32>
    %cst_4 = arith.constant 0.000000e+00 : f32
    %6 = vector.broadcast %cst_4 : f32 to vector<2x64xf32>
    %7 = arith.maximumf %5, %6 : vector<2x64xf32>
    %c96 = arith.constant 96 : index
    %c0_5 = arith.constant 0 : index
    %8 = vector.load %arg2[%c96, %c0_5] : memref<232x256xf32, #tpu.memory_space<vmem>>, vector<8x256xf32>
    %c104 = arith.constant 104 : index
    %c0_6 = arith.constant 0 : index
    %9 = vector.load %arg2[%c104, %c0_6] : memref<232x256xf32, #tpu.memory_space<vmem>>, vector<1x256xf32>
    %c112 = arith.constant 112 : index
    %c0_7 = arith.constant 0 : index
    %10 = vector.load %arg2[%c112, %c0_7] : memref<232x256xf32, #tpu.memory_space<vmem>>, vector<32x128xf32>
    %c144 = arith.constant 144 : index
    %c0_8 = arith.constant 0 : index
    %11 = vector.load %arg2[%c144, %c0_8] : memref<232x256xf32, #tpu.memory_space<vmem>>, vector<1x128xf32>
    %12 = vector.shape_cast %11 : vector<1x128xf32> to vector<1x128xf32>
    %13 = vector.broadcast %12 : vector<1x128xf32> to vector<2x128xf32>
    %c0_9 = arith.constant 0 : index
    %c0_10 = arith.constant 0 : index
    %14 = vector.load %arg1[%c0_9, %c0_10] : memref<16x8xf32, #tpu.memory_space<vmem>>, vector<16x8xf32>
    %cst_11 = arith.constant dense<0.000000e+00> : vector<16x256xf32>
    %15 = tpu.matmul %14, %8, %cst_11 {dimension_numbers = #tpu.dot_dimension_numbers<[1], [0], [0], [1], [0, 0, 1, 1], [], []>} : vector<16x8xf32>, vector<8x256xf32>, vector<16x256xf32> -> vector<16x256xf32>
    %16 = vector.broadcast %9 : vector<1x256xf32> to vector<16x256xf32>
    %17 = arith.addf %15, %16 : vector<16x256xf32>
    %18 = vector.extract_strided_slice %17 {offsets = [0, 0], sizes = [1, 128], strides = [1, 1]} : vector<16x256xf32> to vector<1x128xf32>
    %19 = vector.extract_strided_slice %17 {offsets = [8, 0], sizes = [1, 128], strides = [1, 1]} : vector<16x256xf32> to vector<1x128xf32>
    %20 = tpu.concatenate %18, %19 in 0 : vector<1x128xf32>, vector<1x128xf32> -> vector<2x128xf32>
    %21 = vector.extract_strided_slice %17 {offsets = [7, 128], sizes = [1, 128], strides = [1, 1]} : vector<16x256xf32> to vector<1x128xf32>
    %22 = vector.extract_strided_slice %17 {offsets = [15, 128], sizes = [1, 128], strides = [1, 1]} : vector<16x256xf32> to vector<1x128xf32>
    %23 = tpu.concatenate %21, %22 in 0 : vector<1x128xf32>, vector<1x128xf32> -> vector<2x128xf32>
    %24 = arith.addf %20, %23 : vector<2x128xf32>
    %25 = vector.extract_strided_slice %17 {offsets = [1, 0], sizes = [1, 128], strides = [1, 1]} : vector<16x256xf32> to vector<1x128xf32>
    %26 = vector.extract_strided_slice %17 {offsets = [9, 0], sizes = [1, 128], strides = [1, 1]} : vector<16x256xf32> to vector<1x128xf32>
    %27 = tpu.concatenate %25, %26 in 0 : vector<1x128xf32>, vector<1x128xf32> -> vector<2x128xf32>
    %28 = vector.extract_strided_slice %17 {offsets = [6, 128], sizes = [1, 128], strides = [1, 1]} : vector<16x256xf32> to vector<1x128xf32>
    %29 = vector.extract_strided_slice %17 {offsets = [14, 128], sizes = [1, 128], strides = [1, 1]} : vector<16x256xf32> to vector<1x128xf32>
    %30 = tpu.concatenate %28, %29 in 0 : vector<1x128xf32>, vector<1x128xf32> -> vector<2x128xf32>
    %31 = arith.addf %27, %30 : vector<2x128xf32>
    %32 = vector.extract_strided_slice %17 {offsets = [2, 0], sizes = [1, 128], strides = [1, 1]} : vector<16x256xf32> to vector<1x128xf32>
    %33 = vector.extract_strided_slice %17 {offsets = [10, 0], sizes = [1, 128], strides = [1, 1]} : vector<16x256xf32> to vector<1x128xf32>
    %34 = tpu.concatenate %32, %33 in 0 : vector<1x128xf32>, vector<1x128xf32> -> vector<2x128xf32>
    %35 = vector.extract_strided_slice %17 {offsets = [5, 128], sizes = [1, 128], strides = [1, 1]} : vector<16x256xf32> to vector<1x128xf32>
    %36 = vector.extract_strided_slice %17 {offsets = [13, 128], sizes = [1, 128], strides = [1, 1]} : vector<16x256xf32> to vector<1x128xf32>
    %37 = tpu.concatenate %35, %36 in 0 : vector<1x128xf32>, vector<1x128xf32> -> vector<2x128xf32>
    %38 = arith.addf %34, %37 : vector<2x128xf32>
    %39 = vector.extract_strided_slice %17 {offsets = [3, 0], sizes = [1, 128], strides = [1, 1]} : vector<16x256xf32> to vector<1x128xf32>
    %40 = vector.extract_strided_slice %17 {offsets = [11, 0], sizes = [1, 128], strides = [1, 1]} : vector<16x256xf32> to vector<1x128xf32>
    %41 = tpu.concatenate %39, %40 in 0 : vector<1x128xf32>, vector<1x128xf32> -> vector<2x128xf32>
    %42 = vector.extract_strided_slice %17 {offsets = [4, 128], sizes = [1, 128], strides = [1, 1]} : vector<16x256xf32> to vector<1x128xf32>
    %43 = vector.extract_strided_slice %17 {offsets = [12, 128], sizes = [1, 128], strides = [1, 1]} : vector<16x256xf32> to vector<1x128xf32>
    %44 = tpu.concatenate %42, %43 in 0 : vector<1x128xf32>, vector<1x128xf32> -> vector<2x128xf32>
    %45 = arith.addf %41, %44 : vector<2x128xf32>
    %46 = vector.extract_strided_slice %17 {offsets = [4, 0], sizes = [1, 128], strides = [1, 1]} : vector<16x256xf32> to vector<1x128xf32>
    %47 = vector.extract_strided_slice %17 {offsets = [12, 0], sizes = [1, 128], strides = [1, 1]} : vector<16x256xf32> to vector<1x128xf32>
    %48 = tpu.concatenate %46, %47 in 0 : vector<1x128xf32>, vector<1x128xf32> -> vector<2x128xf32>
    %49 = vector.extract_strided_slice %17 {offsets = [3, 128], sizes = [1, 128], strides = [1, 1]} : vector<16x256xf32> to vector<1x128xf32>
    %50 = vector.extract_strided_slice %17 {offsets = [11, 128], sizes = [1, 128], strides = [1, 1]} : vector<16x256xf32> to vector<1x128xf32>
    %51 = tpu.concatenate %49, %50 in 0 : vector<1x128xf32>, vector<1x128xf32> -> vector<2x128xf32>
    %52 = arith.addf %48, %51 : vector<2x128xf32>
    %53 = vector.extract_strided_slice %17 {offsets = [5, 0], sizes = [1, 128], strides = [1, 1]} : vector<16x256xf32> to vector<1x128xf32>
    %54 = vector.extract_strided_slice %17 {offsets = [13, 0], sizes = [1, 128], strides = [1, 1]} : vector<16x256xf32> to vector<1x128xf32>
    %55 = tpu.concatenate %53, %54 in 0 : vector<1x128xf32>, vector<1x128xf32> -> vector<2x128xf32>
    %56 = vector.extract_strided_slice %17 {offsets = [2, 128], sizes = [1, 128], strides = [1, 1]} : vector<16x256xf32> to vector<1x128xf32>
    %57 = vector.extract_strided_slice %17 {offsets = [10, 128], sizes = [1, 128], strides = [1, 1]} : vector<16x256xf32> to vector<1x128xf32>
    %58 = tpu.concatenate %56, %57 in 0 : vector<1x128xf32>, vector<1x128xf32> -> vector<2x128xf32>
    %59 = arith.addf %55, %58 : vector<2x128xf32>
    %60 = vector.extract_strided_slice %17 {offsets = [6, 0], sizes = [1, 128], strides = [1, 1]} : vector<16x256xf32> to vector<1x128xf32>
    %61 = vector.extract_strided_slice %17 {offsets = [14, 0], sizes = [1, 128], strides = [1, 1]} : vector<16x256xf32> to vector<1x128xf32>
    %62 = tpu.concatenate %60, %61 in 0 : vector<1x128xf32>, vector<1x128xf32> -> vector<2x128xf32>
    %63 = vector.extract_strided_slice %17 {offsets = [1, 128], sizes = [1, 128], strides = [1, 1]} : vector<16x256xf32> to vector<1x128xf32>
    %64 = vector.extract_strided_slice %17 {offsets = [9, 128], sizes = [1, 128], strides = [1, 1]} : vector<16x256xf32> to vector<1x128xf32>
    %65 = tpu.concatenate %63, %64 in 0 : vector<1x128xf32>, vector<1x128xf32> -> vector<2x128xf32>
    %66 = arith.addf %62, %65 : vector<2x128xf32>
    %67 = vector.extract_strided_slice %17 {offsets = [7, 0], sizes = [1, 128], strides = [1, 1]} : vector<16x256xf32> to vector<1x128xf32>
    %68 = vector.extract_strided_slice %17 {offsets = [15, 0], sizes = [1, 128], strides = [1, 1]} : vector<16x256xf32> to vector<1x128xf32>
    %69 = tpu.concatenate %67, %68 in 0 : vector<1x128xf32>, vector<1x128xf32> -> vector<2x128xf32>
    %70 = vector.extract_strided_slice %17 {offsets = [0, 128], sizes = [1, 128], strides = [1, 1]} : vector<16x256xf32> to vector<1x128xf32>
    %71 = vector.extract_strided_slice %17 {offsets = [8, 128], sizes = [1, 128], strides = [1, 1]} : vector<16x256xf32> to vector<1x128xf32>
    %72 = tpu.concatenate %70, %71 in 0 : vector<1x128xf32>, vector<1x128xf32> -> vector<2x128xf32>
    %73 = arith.addf %69, %72 : vector<2x128xf32>
    %74 = vector.extract_strided_slice %7 {offsets = [0, 0], sizes = [2, 32], strides = [1, 1]} : vector<2x64xf32> to vector<2x32xf32>
    %cst_12 = arith.constant dense<0.000000e+00> : vector<2x128xf32>
    %75 = tpu.matmul %74, %10, %cst_12 {dimension_numbers = #tpu.dot_dimension_numbers<[1], [0], [0], [1], [0, 0, 1, 1], [], []>} : vector<2x32xf32>, vector<32x128xf32>, vector<2x128xf32> -> vector<2x128xf32>
    %76 = arith.addf %75, %13 : vector<2x128xf32>
    %77 = vector.extract_strided_slice %24 {offsets = [0, 0], sizes = [2, 64], strides = [1, 1]} : vector<2x128xf32> to vector<2x64xf32>
    %78 = vector.extract_strided_slice %76 {offsets = [0, 0], sizes = [2, 64], strides = [1, 1]} : vector<2x128xf32> to vector<2x64xf32>
    %79 = arith.addf %77, %78 : vector<2x64xf32>
    %80 = arith.negf %79 : vector<2x64xf32>
    %81 = math.exp %80 : vector<2x64xf32>
    %cst_13 = arith.constant 1.000000e+00 : f32
    %82 = vector.broadcast %cst_13 : f32 to vector<2x64xf32>
    %83 = arith.addf %82, %81 : vector<2x64xf32>
    %84 = arith.divf %82, %83 : vector<2x64xf32>
    %85 = vector.extract_strided_slice %84 {offsets = [0, 0], sizes = [2, 32], strides = [1, 1]} : vector<2x64xf32> to vector<2x32xf32>
    %86 = vector.extract_strided_slice %84 {offsets = [0, 32], sizes = [2, 32], strides = [1, 1]} : vector<2x64xf32> to vector<2x32xf32>
    %87 = vector.extract_strided_slice %24 {offsets = [0, 64], sizes = [2, 32], strides = [1, 1]} : vector<2x128xf32> to vector<2x32xf32>
    %88 = vector.extract_strided_slice %76 {offsets = [0, 64], sizes = [2, 32], strides = [1, 1]} : vector<2x128xf32> to vector<2x32xf32>
    %89 = arith.mulf %85, %88 : vector<2x32xf32>
    %90 = arith.addf %87, %89 : vector<2x32xf32>
    %91 = math.tanh %90 : vector<2x32xf32>
    %92 = arith.subf %74, %91 : vector<2x32xf32>
    %93 = arith.mulf %86, %92 : vector<2x32xf32>
    %94 = arith.addf %91, %93 : vector<2x32xf32>
    %95 = vector.extract_strided_slice %94 {offsets = [0, 0], sizes = [2, 16], strides = [1, 1]} : vector<2x32xf32> to vector<2x16xf32>
    %c0_14 = arith.constant 0 : index
    %c0_15 = arith.constant 0 : index
    %96 = vector.load %arg4[%c0_14, %c0_15] : memref<16x32xf32, #tpu.memory_space<vmem>>, vector<2x16xf32>
    tpu.vector_store %arg4[%c0_14, %c0_15], %95 {strides = array<i32>} : memref<16x32xf32, #tpu.memory_space<vmem>>, vector<2x16xf32>,
    %97 = vector.extract_strided_slice %94 {offsets = [0, 16], sizes = [2, 16], strides = [1, 1]} : vector<2x32xf32> to vector<2x16xf32>
    %c14 = arith.constant 14 : index
    %c16_16 = arith.constant 16 : index
    %98 = vector.load %arg4[%c14, %c16_16] : memref<16x32xf32, #tpu.memory_space<vmem>>, vector<2x16xf32>
    tpu.vector_store %arg4[%c14, %c16_16], %97 {strides = array<i32>} : memref<16x32xf32, #tpu.memory_space<vmem>>, vector<2x16xf32>,
    %cst_17 = arith.constant dense<0.000000e+00> : vector<2x128xf32>
    %99 = tpu.matmul %94, %10, %cst_17 {dimension_numbers = #tpu.dot_dimension_numbers<[1], [0], [0], [1], [0, 0, 1, 1], [], []>} : vector<2x32xf32>, vector<32x128xf32>, vector<2x128xf32> -> vector<2x128xf32>
    %100 = arith.addf %99, %13 : vector<2x128xf32>
    %101 = vector.extract_strided_slice %31 {offsets = [0, 0], sizes = [2, 64], strides = [1, 1]} : vector<2x128xf32> to vector<2x64xf32>
    %102 = vector.extract_strided_slice %100 {offsets = [0, 0], sizes = [2, 64], strides = [1, 1]} : vector<2x128xf32> to vector<2x64xf32>
    %103 = arith.addf %101, %102 : vector<2x64xf32>
    %104 = arith.negf %103 : vector<2x64xf32>
    %105 = math.exp %104 : vector<2x64xf32>
    %cst_18 = arith.constant 1.000000e+00 : f32
    %106 = vector.broadcast %cst_18 : f32 to vector<2x64xf32>
    %107 = arith.addf %106, %105 : vector<2x64xf32>
    %108 = arith.divf %106, %107 : vector<2x64xf32>
    %109 = vector.extract_strided_slice %108 {offsets = [0, 0], sizes = [2, 32], strides = [1, 1]} : vector<2x64xf32> to vector<2x32xf32>
    %110 = vector.extract_strided_slice %108 {offsets = [0, 32], sizes = [2, 32], strides = [1, 1]} : vector<2x64xf32> to vector<2x32xf32>
    %111 = vector.extract_strided_slice %31 {offsets = [0, 64], sizes = [2, 32], strides = [1, 1]} : vector<2x128xf32> to vector<2x32xf32>
    %112 = vector.extract_strided_slice %100 {offsets = [0, 64], sizes = [2, 32], strides = [1, 1]} : vector<2x128xf32> to vector<2x32xf32>
    %113 = arith.mulf %109, %112 : vector<2x32xf32>
    %114 = arith.addf %111, %113 : vector<2x32xf32>
    %115 = math.tanh %114 : vector<2x32xf32>
    %116 = arith.subf %94, %115 : vector<2x32xf32>
    %117 = arith.mulf %110, %116 : vector<2x32xf32>
    %118 = arith.addf %115, %117 : vector<2x32xf32>
    %119 = vector.extract_strided_slice %118 {offsets = [0, 0], sizes = [2, 16], strides = [1, 1]} : vector<2x32xf32> to vector<2x16xf32>
    %c2 = arith.constant 2 : index
    %c0_19 = arith.constant 0 : index
    %120 = vector.load %arg4[%c2, %c0_19] : memref<16x32xf32, #tpu.memory_space<vmem>>, vector<2x16xf32>
    tpu.vector_store %arg4[%c2, %c0_19], %119 {strides = array<i32>} : memref<16x32xf32, #tpu.memory_space<vmem>>, vector<2x16xf32>,
    %121 = vector.extract_strided_slice %118 {offsets = [0, 16], sizes = [2, 16], strides = [1, 1]} : vector<2x32xf32> to vector<2x16xf32>
    %c12 = arith.constant 12 : index
    %c16_20 = arith.constant 16 : index
    %122 = vector.load %arg4[%c12, %c16_20] : memref<16x32xf32, #tpu.memory_space<vmem>>, vector<2x16xf32>
    tpu.vector_store %arg4[%c12, %c16_20], %121 {strides = array<i32>} : memref<16x32xf32, #tpu.memory_space<vmem>>, vector<2x16xf32>,
    %cst_21 = arith.constant dense<0.000000e+00> : vector<2x128xf32>
    %123 = tpu.matmul %118, %10, %cst_21 {dimension_numbers = #tpu.dot_dimension_numbers<[1], [0], [0], [1], [0, 0, 1, 1], [], []>} : vector<2x32xf32>, vector<32x128xf32>, vector<2x128xf32> -> vector<2x128xf32>
    %124 = arith.addf %123, %13 : vector<2x128xf32>
    %125 = vector.extract_strided_slice %38 {offsets = [0, 0], sizes = [2, 64], strides = [1, 1]} : vector<2x128xf32> to vector<2x64xf32>
    %126 = vector.extract_strided_slice %124 {offsets = [0, 0], sizes = [2, 64], strides = [1, 1]} : vector<2x128xf32> to vector<2x64xf32>
    %127 = arith.addf %125, %126 : vector<2x64xf32>
    %128 = arith.negf %127 : vector<2x64xf32>
    %129 = math.exp %128 : vector<2x64xf32>
    %cst_22 = arith.constant 1.000000e+00 : f32
    %130 = vector.broadcast %cst_22 : f32 to vector<2x64xf32>
    %131 = arith.addf %130, %129 : vector<2x64xf32>
    %132 = arith.divf %130, %131 : vector<2x64xf32>
    %133 = vector.extract_strided_slice %132 {offsets = [0, 0], sizes = [2, 32], strides = [1, 1]} : vector<2x64xf32> to vector<2x32xf32>
    %134 = vector.extract_strided_slice %132 {offsets = [0, 32], sizes = [2, 32], strides = [1, 1]} : vector<2x64xf32> to vector<2x32xf32>
    %135 = vector.extract_strided_slice %38 {offsets = [0, 64], sizes = [2, 32], strides = [1, 1]} : vector<2x128xf32> to vector<2x32xf32>
    %136 = vector.extract_strided_slice %124 {offsets = [0, 64], sizes = [2, 32], strides = [1, 1]} : vector<2x128xf32> to vector<2x32xf32>
    %137 = arith.mulf %133, %136 : vector<2x32xf32>
    %138 = arith.addf %135, %137 : vector<2x32xf32>
    %139 = math.tanh %138 : vector<2x32xf32>
    %140 = arith.subf %118, %139 : vector<2x32xf32>
    %141 = arith.mulf %134, %140 : vector<2x32xf32>
    %142 = arith.addf %139, %141 : vector<2x32xf32>
    %143 = vector.extract_strided_slice %142 {offsets = [0, 0], sizes = [2, 16], strides = [1, 1]} : vector<2x32xf32> to vector<2x16xf32>
    %c4 = arith.constant 4 : index
    %c0_23 = arith.constant 0 : index
    %144 = vector.load %arg4[%c4, %c0_23] : memref<16x32xf32, #tpu.memory_space<vmem>>, vector<2x16xf32>
    tpu.vector_store %arg4[%c4, %c0_23], %143 {strides = array<i32>} : memref<16x32xf32, #tpu.memory_space<vmem>>, vector<2x16xf32>,
    %145 = vector.extract_strided_slice %142 {offsets = [0, 16], sizes = [2, 16], strides = [1, 1]} : vector<2x32xf32> to vector<2x16xf32>
    %c10 = arith.constant 10 : index
    %c16_24 = arith.constant 16 : index
    %146 = vector.load %arg4[%c10, %c16_24] : memref<16x32xf32, #tpu.memory_space<vmem>>, vector<2x16xf32>
    tpu.vector_store %arg4[%c10, %c16_24], %145 {strides = array<i32>} : memref<16x32xf32, #tpu.memory_space<vmem>>, vector<2x16xf32>,
    %cst_25 = arith.constant dense<0.000000e+00> : vector<2x128xf32>
    %147 = tpu.matmul %142, %10, %cst_25 {dimension_numbers = #tpu.dot_dimension_numbers<[1], [0], [0], [1], [0, 0, 1, 1], [], []>} : vector<2x32xf32>, vector<32x128xf32>, vector<2x128xf32> -> vector<2x128xf32>
    %148 = arith.addf %147, %13 : vector<2x128xf32>
    %149 = vector.extract_strided_slice %45 {offsets = [0, 0], sizes = [2, 64], strides = [1, 1]} : vector<2x128xf32> to vector<2x64xf32>
    %150 = vector.extract_strided_slice %148 {offsets = [0, 0], sizes = [2, 64], strides = [1, 1]} : vector<2x128xf32> to vector<2x64xf32>
    %151 = arith.addf %149, %150 : vector<2x64xf32>
    %152 = arith.negf %151 : vector<2x64xf32>
    %153 = math.exp %152 : vector<2x64xf32>
    %cst_26 = arith.constant 1.000000e+00 : f32
    %154 = vector.broadcast %cst_26 : f32 to vector<2x64xf32>
    %155 = arith.addf %154, %153 : vector<2x64xf32>
    %156 = arith.divf %154, %155 : vector<2x64xf32>
    %157 = vector.extract_strided_slice %156 {offsets = [0, 0], sizes = [2, 32], strides = [1, 1]} : vector<2x64xf32> to vector<2x32xf32>
    %158 = vector.extract_strided_slice %156 {offsets = [0, 32], sizes = [2, 32], strides = [1, 1]} : vector<2x64xf32> to vector<2x32xf32>
    %159 = vector.extract_strided_slice %45 {offsets = [0, 64], sizes = [2, 32], strides = [1, 1]} : vector<2x128xf32> to vector<2x32xf32>
    %160 = vector.extract_strided_slice %148 {offsets = [0, 64], sizes = [2, 32], strides = [1, 1]} : vector<2x128xf32> to vector<2x32xf32>
    %161 = arith.mulf %157, %160 : vector<2x32xf32>
    %162 = arith.addf %159, %161 : vector<2x32xf32>
    %163 = math.tanh %162 : vector<2x32xf32>
    %164 = arith.subf %142, %163 : vector<2x32xf32>
    %165 = arith.mulf %158, %164 : vector<2x32xf32>
    %166 = arith.addf %163, %165 : vector<2x32xf32>
    %167 = vector.extract_strided_slice %166 {offsets = [0, 0], sizes = [2, 16], strides = [1, 1]} : vector<2x32xf32> to vector<2x16xf32>
    %c6 = arith.constant 6 : index
    %c0_27 = arith.constant 0 : index
    %168 = vector.load %arg4[%c6, %c0_27] : memref<16x32xf32, #tpu.memory_space<vmem>>, vector<2x16xf32>
    tpu.vector_store %arg4[%c6, %c0_27], %167 {strides = array<i32>} : memref<16x32xf32, #tpu.memory_space<vmem>>, vector<2x16xf32>,
    %169 = vector.extract_strided_slice %166 {offsets = [0, 16], sizes = [2, 16], strides = [1, 1]} : vector<2x32xf32> to vector<2x16xf32>
    %c8 = arith.constant 8 : index
    %c16_28 = arith.constant 16 : index
    %170 = vector.load %arg4[%c8, %c16_28] : memref<16x32xf32, #tpu.memory_space<vmem>>, vector<2x16xf32>
    tpu.vector_store %arg4[%c8, %c16_28], %169 {strides = array<i32>} : memref<16x32xf32, #tpu.memory_space<vmem>>, vector<2x16xf32>,
    %cst_29 = arith.constant dense<0.000000e+00> : vector<2x128xf32>
    %171 = tpu.matmul %166, %10, %cst_29 {dimension_numbers = #tpu.dot_dimension_numbers<[1], [0], [0], [1], [0, 0, 1, 1], [], []>} : vector<2x32xf32>, vector<32x128xf32>, vector<2x128xf32> -> vector<2x128xf32>
    %172 = arith.addf %171, %13 : vector<2x128xf32>
    %173 = vector.extract_strided_slice %52 {offsets = [0, 0], sizes = [2, 64], strides = [1, 1]} : vector<2x128xf32> to vector<2x64xf32>
    %174 = vector.extract_strided_slice %172 {offsets = [0, 0], sizes = [2, 64], strides = [1, 1]} : vector<2x128xf32> to vector<2x64xf32>
    %175 = arith.addf %173, %174 : vector<2x64xf32>
    %176 = arith.negf %175 : vector<2x64xf32>
    %177 = math.exp %176 : vector<2x64xf32>
    %cst_30 = arith.constant 1.000000e+00 : f32
    %178 = vector.broadcast %cst_30 : f32 to vector<2x64xf32>
    %179 = arith.addf %178, %177 : vector<2x64xf32>
    %180 = arith.divf %178, %179 : vector<2x64xf32>
    %181 = vector.extract_strided_slice %180 {offsets = [0, 0], sizes = [2, 32], strides = [1, 1]} : vector<2x64xf32> to vector<2x32xf32>
    %182 = vector.extract_strided_slice %180 {offsets = [0, 32], sizes = [2, 32], strides = [1, 1]} : vector<2x64xf32> to vector<2x32xf32>
    %183 = vector.extract_strided_slice %52 {offsets = [0, 64], sizes = [2, 32], strides = [1, 1]} : vector<2x128xf32> to vector<2x32xf32>
    %184 = vector.extract_strided_slice %172 {offsets = [0, 64], sizes = [2, 32], strides = [1, 1]} : vector<2x128xf32> to vector<2x32xf32>
    %185 = arith.mulf %181, %184 : vector<2x32xf32>
    %186 = arith.addf %183, %185 : vector<2x32xf32>
    %187 = math.tanh %186 : vector<2x32xf32>
    %188 = arith.subf %166, %187 : vector<2x32xf32>
    %189 = arith.mulf %182, %188 : vector<2x32xf32>
    %190 = arith.addf %187, %189 : vector<2x32xf32>
    %191 = vector.extract_strided_slice %190 {offsets = [0, 0], sizes = [2, 16], strides = [1, 1]} : vector<2x32xf32> to vector<2x16xf32>
    %c8_31 = arith.constant 8 : index
    %c0_32 = arith.constant 0 : index
    %192 = vector.load %arg4[%c8_31, %c0_32] : memref<16x32xf32, #tpu.memory_space<vmem>>, vector<2x16xf32>
    tpu.vector_store %arg4[%c8_31, %c0_32], %191 {strides = array<i32>} : memref<16x32xf32, #tpu.memory_space<vmem>>, vector<2x16xf32>,
    %193 = vector.extract_strided_slice %190 {offsets = [0, 16], sizes = [2, 16], strides = [1, 1]} : vector<2x32xf32> to vector<2x16xf32>
    %c6_33 = arith.constant 6 : index
    %c16_34 = arith.constant 16 : index
    %194 = vector.load %arg4[%c6_33, %c16_34] : memref<16x32xf32, #tpu.memory_space<vmem>>, vector<2x16xf32>
    tpu.vector_store %arg4[%c6_33, %c16_34], %193 {strides = array<i32>} : memref<16x32xf32, #tpu.memory_space<vmem>>, vector<2x16xf32>,
    %cst_35 = arith.constant dense<0.000000e+00> : vector<2x128xf32>
    %195 = tpu.matmul %190, %10, %cst_35 {dimension_numbers = #tpu.dot_dimension_numbers<[1], [0], [0], [1], [0, 0, 1, 1], [], []>} : vector<2x32xf32>, vector<32x128xf32>, vector<2x128xf32> -> vector<2x128xf32>
    %196 = arith.addf %195, %13 : vector<2x128xf32>
    %197 = vector.extract_strided_slice %59 {offsets = [0, 0], sizes = [2, 64], strides = [1, 1]} : vector<2x128xf32> to vector<2x64xf32>
    %198 = vector.extract_strided_slice %196 {offsets = [0, 0], sizes = [2, 64], strides = [1, 1]} : vector<2x128xf32> to vector<2x64xf32>
    %199 = arith.addf %197, %198 : vector<2x64xf32>
    %200 = arith.negf %199 : vector<2x64xf32>
    %201 = math.exp %200 : vector<2x64xf32>
    %cst_36 = arith.constant 1.000000e+00 : f32
    %202 = vector.broadcast %cst_36 : f32 to vector<2x64xf32>
    %203 = arith.addf %202, %201 : vector<2x64xf32>
    %204 = arith.divf %202, %203 : vector<2x64xf32>
    %205 = vector.extract_strided_slice %204 {offsets = [0, 0], sizes = [2, 32], strides = [1, 1]} : vector<2x64xf32> to vector<2x32xf32>
    %206 = vector.extract_strided_slice %204 {offsets = [0, 32], sizes = [2, 32], strides = [1, 1]} : vector<2x64xf32> to vector<2x32xf32>
    %207 = vector.extract_strided_slice %59 {offsets = [0, 64], sizes = [2, 32], strides = [1, 1]} : vector<2x128xf32> to vector<2x32xf32>
    %208 = vector.extract_strided_slice %196 {offsets = [0, 64], sizes = [2, 32], strides = [1, 1]} : vector<2x128xf32> to vector<2x32xf32>
    %209 = arith.mulf %205, %208 : vector<2x32xf32>
    %210 = arith.addf %207, %209 : vector<2x32xf32>
    %211 = math.tanh %210 : vector<2x32xf32>
    %212 = arith.subf %190, %211 : vector<2x32xf32>
    %213 = arith.mulf %206, %212 : vector<2x32xf32>
    %214 = arith.addf %211, %213 : vector<2x32xf32>
    %215 = vector.extract_strided_slice %214 {offsets = [0, 0], sizes = [2, 16], strides = [1, 1]} : vector<2x32xf32> to vector<2x16xf32>
    %c10_37 = arith.constant 10 : index
    %c0_38 = arith.constant 0 : index
    %216 = vector.load %arg4[%c10_37, %c0_38] : memref<16x32xf32, #tpu.memory_space<vmem>>, vector<2x16xf32>
    tpu.vector_store %arg4[%c10_37, %c0_38], %215 {strides = array<i32>} : memref<16x32xf32, #tpu.memory_space<vmem>>, vector<2x16xf32>,
    %217 = vector.extract_strided_slice %214 {offsets = [0, 16], sizes = [2, 16], strides = [1, 1]} : vector<2x32xf32> to vector<2x16xf32>
    %c4_39 = arith.constant 4 : index
    %c16_40 = arith.constant 16 : index
    %218 = vector.load %arg4[%c4_39, %c16_40] : memref<16x32xf32, #tpu.memory_space<vmem>>, vector<2x16xf32>
    tpu.vector_store %arg4[%c4_39, %c16_40], %217 {strides = array<i32>} : memref<16x32xf32, #tpu.memory_space<vmem>>, vector<2x16xf32>,
    %cst_41 = arith.constant dense<0.000000e+00> : vector<2x128xf32>
    %219 = tpu.matmul %214, %10, %cst_41 {dimension_numbers = #tpu.dot_dimension_numbers<[1], [0], [0], [1], [0, 0, 1, 1], [], []>} : vector<2x32xf32>, vector<32x128xf32>, vector<2x128xf32> -> vector<2x128xf32>
    %220 = arith.addf %219, %13 : vector<2x128xf32>
    %221 = vector.extract_strided_slice %66 {offsets = [0, 0], sizes = [2, 64], strides = [1, 1]} : vector<2x128xf32> to vector<2x64xf32>
    %222 = vector.extract_strided_slice %220 {offsets = [0, 0], sizes = [2, 64], strides = [1, 1]} : vector<2x128xf32> to vector<2x64xf32>
    %223 = arith.addf %221, %222 : vector<2x64xf32>
    %224 = arith.negf %223 : vector<2x64xf32>
    %225 = math.exp %224 : vector<2x64xf32>
    %cst_42 = arith.constant 1.000000e+00 : f32
    %226 = vector.broadcast %cst_42 : f32 to vector<2x64xf32>
    %227 = arith.addf %226, %225 : vector<2x64xf32>
    %228 = arith.divf %226, %227 : vector<2x64xf32>
    %229 = vector.extract_strided_slice %228 {offsets = [0, 0], sizes = [2, 32], strides = [1, 1]} : vector<2x64xf32> to vector<2x32xf32>
    %230 = vector.extract_strided_slice %228 {offsets = [0, 32], sizes = [2, 32], strides = [1, 1]} : vector<2x64xf32> to vector<2x32xf32>
    %231 = vector.extract_strided_slice %66 {offsets = [0, 64], sizes = [2, 32], strides = [1, 1]} : vector<2x128xf32> to vector<2x32xf32>
    %232 = vector.extract_strided_slice %220 {offsets = [0, 64], sizes = [2, 32], strides = [1, 1]} : vector<2x128xf32> to vector<2x32xf32>
    %233 = arith.mulf %229, %232 : vector<2x32xf32>
    %234 = arith.addf %231, %233 : vector<2x32xf32>
    %235 = math.tanh %234 : vector<2x32xf32>
    %236 = arith.subf %214, %235 : vector<2x32xf32>
    %237 = arith.mulf %230, %236 : vector<2x32xf32>
    %238 = arith.addf %235, %237 : vector<2x32xf32>
    %239 = vector.extract_strided_slice %238 {offsets = [0, 0], sizes = [2, 16], strides = [1, 1]} : vector<2x32xf32> to vector<2x16xf32>
    %c12_43 = arith.constant 12 : index
    %c0_44 = arith.constant 0 : index
    %240 = vector.load %arg4[%c12_43, %c0_44] : memref<16x32xf32, #tpu.memory_space<vmem>>, vector<2x16xf32>
    tpu.vector_store %arg4[%c12_43, %c0_44], %239 {strides = array<i32>} : memref<16x32xf32, #tpu.memory_space<vmem>>, vector<2x16xf32>,
    %241 = vector.extract_strided_slice %238 {offsets = [0, 16], sizes = [2, 16], strides = [1, 1]} : vector<2x32xf32> to vector<2x16xf32>
    %c2_45 = arith.constant 2 : index
    %c16_46 = arith.constant 16 : index
    %242 = vector.load %arg4[%c2_45, %c16_46] : memref<16x32xf32, #tpu.memory_space<vmem>>, vector<2x16xf32>
    tpu.vector_store %arg4[%c2_45, %c16_46], %241 {strides = array<i32>} : memref<16x32xf32, #tpu.memory_space<vmem>>, vector<2x16xf32>,
    %cst_47 = arith.constant dense<0.000000e+00> : vector<2x128xf32>
    %243 = tpu.matmul %238, %10, %cst_47 {dimension_numbers = #tpu.dot_dimension_numbers<[1], [0], [0], [1], [0, 0, 1, 1], [], []>} : vector<2x32xf32>, vector<32x128xf32>, vector<2x128xf32> -> vector<2x128xf32>
    %244 = arith.addf %243, %13 : vector<2x128xf32>
    %245 = vector.extract_strided_slice %73 {offsets = [0, 0], sizes = [2, 64], strides = [1, 1]} : vector<2x128xf32> to vector<2x64xf32>
    %246 = vector.extract_strided_slice %244 {offsets = [0, 0], sizes = [2, 64], strides = [1, 1]} : vector<2x128xf32> to vector<2x64xf32>
    %247 = arith.addf %245, %246 : vector<2x64xf32>
    %248 = arith.negf %247 : vector<2x64xf32>
    %249 = math.exp %248 : vector<2x64xf32>
    %cst_48 = arith.constant 1.000000e+00 : f32
    %250 = vector.broadcast %cst_48 : f32 to vector<2x64xf32>
    %251 = arith.addf %250, %249 : vector<2x64xf32>
    %252 = arith.divf %250, %251 : vector<2x64xf32>
    %253 = vector.extract_strided_slice %252 {offsets = [0, 0], sizes = [2, 32], strides = [1, 1]} : vector<2x64xf32> to vector<2x32xf32>
    %254 = vector.extract_strided_slice %252 {offsets = [0, 32], sizes = [2, 32], strides = [1, 1]} : vector<2x64xf32> to vector<2x32xf32>
    %255 = vector.extract_strided_slice %73 {offsets = [0, 64], sizes = [2, 32], strides = [1, 1]} : vector<2x128xf32> to vector<2x32xf32>
    %256 = vector.extract_strided_slice %244 {offsets = [0, 64], sizes = [2, 32], strides = [1, 1]} : vector<2x128xf32> to vector<2x32xf32>
    %257 = arith.mulf %253, %256 : vector<2x32xf32>
    %258 = arith.addf %255, %257 : vector<2x32xf32>
    %259 = math.tanh %258 : vector<2x32xf32>
    %260 = arith.subf %238, %259 : vector<2x32xf32>
    %261 = arith.mulf %254, %260 : vector<2x32xf32>
    %262 = arith.addf %259, %261 : vector<2x32xf32>
    %263 = vector.extract_strided_slice %262 {offsets = [0, 0], sizes = [2, 16], strides = [1, 1]} : vector<2x32xf32> to vector<2x16xf32>
    %c14_49 = arith.constant 14 : index
    %c0_50 = arith.constant 0 : index
    %264 = vector.load %arg4[%c14_49, %c0_50] : memref<16x32xf32, #tpu.memory_space<vmem>>, vector<2x16xf32>
    tpu.vector_store %arg4[%c14_49, %c0_50], %263 {strides = array<i32>} : memref<16x32xf32, #tpu.memory_space<vmem>>, vector<2x16xf32>,
    %265 = vector.extract_strided_slice %262 {offsets = [0, 16], sizes = [2, 16], strides = [1, 1]} : vector<2x32xf32> to vector<2x16xf32>
    %c0_51 = arith.constant 0 : index
    %c16_52 = arith.constant 16 : index
    %266 = vector.load %arg4[%c0_51, %c16_52] : memref<16x32xf32, #tpu.memory_space<vmem>>, vector<2x16xf32>
    tpu.vector_store %arg4[%c0_51, %c16_52], %265 {strides = array<i32>} : memref<16x32xf32, #tpu.memory_space<vmem>>, vector<2x16xf32>,
    %c152 = arith.constant 152 : index
    %c0_53 = arith.constant 0 : index
    %267 = vector.load %arg2[%c152, %c0_53] : memref<232x256xf32, #tpu.memory_space<vmem>>, vector<32x256xf32>
    %c184 = arith.constant 184 : index
    %c0_54 = arith.constant 0 : index
    %268 = vector.load %arg2[%c184, %c0_54] : memref<232x256xf32, #tpu.memory_space<vmem>>, vector<1x256xf32>
    %c192 = arith.constant 192 : index
    %c0_55 = arith.constant 0 : index
    %269 = vector.load %arg2[%c192, %c0_55] : memref<232x256xf32, #tpu.memory_space<vmem>>, vector<32x128xf32>
    %c224 = arith.constant 224 : index
    %c0_56 = arith.constant 0 : index
    %270 = vector.load %arg2[%c224, %c0_56] : memref<232x256xf32, #tpu.memory_space<vmem>>, vector<1x128xf32>
    %271 = vector.shape_cast %270 : vector<1x128xf32> to vector<1x128xf32>
    %272 = vector.broadcast %271 : vector<1x128xf32> to vector<2x128xf32>
    %c0_57 = arith.constant 0 : index
    %c0_58 = arith.constant 0 : index
    %273 = vector.load %arg4[%c0_57, %c0_58] : memref<16x32xf32, #tpu.memory_space<vmem>>, vector<16x32xf32>
    %cst_59 = arith.constant dense<0.000000e+00> : vector<16x256xf32>
    %274 = tpu.matmul %273, %267, %cst_59 {dimension_numbers = #tpu.dot_dimension_numbers<[1], [0], [0], [1], [0, 0, 1, 1], [], []>} : vector<16x32xf32>, vector<32x256xf32>, vector<16x256xf32> -> vector<16x256xf32>
    %275 = vector.broadcast %268 : vector<1x256xf32> to vector<16x256xf32>
    %276 = arith.addf %274, %275 : vector<16x256xf32>
    %277 = vector.extract_strided_slice %276 {offsets = [0, 0], sizes = [2, 128], strides = [1, 1]} : vector<16x256xf32> to vector<2x128xf32>
    %278 = vector.extract_strided_slice %276 {offsets = [14, 128], sizes = [2, 128], strides = [1, 1]} : vector<16x256xf32> to vector<2x128xf32>
    %279 = arith.addf %277, %278 : vector<2x128xf32>
    %280 = vector.extract_strided_slice %276 {offsets = [2, 0], sizes = [2, 128], strides = [1, 1]} : vector<16x256xf32> to vector<2x128xf32>
    %281 = vector.extract_strided_slice %276 {offsets = [12, 128], sizes = [2, 128], strides = [1, 1]} : vector<16x256xf32> to vector<2x128xf32>
    %282 = arith.addf %280, %281 : vector<2x128xf32>
    %283 = vector.extract_strided_slice %276 {offsets = [4, 0], sizes = [2, 128], strides = [1, 1]} : vector<16x256xf32> to vector<2x128xf32>
    %284 = vector.extract_strided_slice %276 {offsets = [10, 128], sizes = [2, 128], strides = [1, 1]} : vector<16x256xf32> to vector<2x128xf32>
    %285 = arith.addf %283, %284 : vector<2x128xf32>
    %286 = vector.extract_strided_slice %276 {offsets = [6, 0], sizes = [2, 128], strides = [1, 1]} : vector<16x256xf32> to vector<2x128xf32>
    %287 = vector.extract_strided_slice %276 {offsets = [8, 128], sizes = [2, 128], strides = [1, 1]} : vector<16x256xf32> to vector<2x128xf32>
    %288 = arith.addf %286, %287 : vector<2x128xf32>
    %289 = vector.extract_strided_slice %276 {offsets = [8, 0], sizes = [2, 128], strides = [1, 1]} : vector<16x256xf32> to vector<2x128xf32>
    %290 = vector.extract_strided_slice %276 {offsets = [6, 128], sizes = [2, 128], strides = [1, 1]} : vector<16x256xf32> to vector<2x128xf32>
    %291 = arith.addf %289, %290 : vector<2x128xf32>
    %292 = vector.extract_strided_slice %276 {offsets = [10, 0], sizes = [2, 128], strides = [1, 1]} : vector<16x256xf32> to vector<2x128xf32>
    %293 = vector.extract_strided_slice %276 {offsets = [4, 128], sizes = [2, 128], strides = [1, 1]} : vector<16x256xf32> to vector<2x128xf32>
    %294 = arith.addf %292, %293 : vector<2x128xf32>
    %295 = vector.extract_strided_slice %276 {offsets = [12, 0], sizes = [2, 128], strides = [1, 1]} : vector<16x256xf32> to vector<2x128xf32>
    %296 = vector.extract_strided_slice %276 {offsets = [2, 128], sizes = [2, 128], strides = [1, 1]} : vector<16x256xf32> to vector<2x128xf32>
    %297 = arith.addf %295, %296 : vector<2x128xf32>
    %298 = vector.extract_strided_slice %276 {offsets = [14, 0], sizes = [2, 128], strides = [1, 1]} : vector<16x256xf32> to vector<2x128xf32>
    %299 = vector.extract_strided_slice %276 {offsets = [0, 128], sizes = [2, 128], strides = [1, 1]} : vector<16x256xf32> to vector<2x128xf32>
    %300 = arith.addf %298, %299 : vector<2x128xf32>
    %301 = vector.extract_strided_slice %7 {offsets = [0, 32], sizes = [2, 32], strides = [1, 1]} : vector<2x64xf32> to vector<2x32xf32>
    %cst_60 = arith.constant dense<0.000000e+00> : vector<2x128xf32>
    %302 = tpu.matmul %301, %269, %cst_60 {dimension_numbers = #tpu.dot_dimension_numbers<[1], [0], [0], [1], [0, 0, 1, 1], [], []>} : vector<2x32xf32>, vector<32x128xf32>, vector<2x128xf32> -> vector<2x128xf32>
    %303 = arith.addf %302, %272 : vector<2x128xf32>
    %304 = vector.extract_strided_slice %279 {offsets = [0, 0], sizes = [2, 64], strides = [1, 1]} : vector<2x128xf32> to vector<2x64xf32>
    %305 = vector.extract_strided_slice %303 {offsets = [0, 0], sizes = [2, 64], strides = [1, 1]} : vector<2x128xf32> to vector<2x64xf32>
    %306 = arith.addf %304, %305 : vector<2x64xf32>
    %307 = arith.negf %306 : vector<2x64xf32>
    %308 = math.exp %307 : vector<2x64xf32>
    %cst_61 = arith.constant 1.000000e+00 : f32
    %309 = vector.broadcast %cst_61 : f32 to vector<2x64xf32>
    %310 = arith.addf %309, %308 : vector<2x64xf32>
    %311 = arith.divf %309, %310 : vector<2x64xf32>
    %312 = vector.extract_strided_slice %311 {offsets = [0, 0], sizes = [2, 32], strides = [1, 1]} : vector<2x64xf32> to vector<2x32xf32>
    %313 = vector.extract_strided_slice %311 {offsets = [0, 32], sizes = [2, 32], strides = [1, 1]} : vector<2x64xf32> to vector<2x32xf32>
    %314 = vector.extract_strided_slice %279 {offsets = [0, 64], sizes = [2, 32], strides = [1, 1]} : vector<2x128xf32> to vector<2x32xf32>
    %315 = vector.extract_strided_slice %303 {offsets = [0, 64], sizes = [2, 32], strides = [1, 1]} : vector<2x128xf32> to vector<2x32xf32>
    %316 = arith.mulf %312, %315 : vector<2x32xf32>
    %317 = arith.addf %314, %316 : vector<2x32xf32>
    %318 = math.tanh %317 : vector<2x32xf32>
    %319 = arith.subf %301, %318 : vector<2x32xf32>
    %320 = arith.mulf %313, %319 : vector<2x32xf32>
    %321 = arith.addf %318, %320 : vector<2x32xf32>
    %cst_62 = arith.constant dense<0.000000e+00> : vector<2x128xf32>
    %322 = tpu.matmul %321, %269, %cst_62 {dimension_numbers = #tpu.dot_dimension_numbers<[1], [0], [0], [1], [0, 0, 1, 1], [], []>} : vector<2x32xf32>, vector<32x128xf32>, vector<2x128xf32> -> vector<2x128xf32>
    %323 = arith.addf %322, %272 : vector<2x128xf32>
    %324 = vector.extract_strided_slice %282 {offsets = [0, 0], sizes = [2, 64], strides = [1, 1]} : vector<2x128xf32> to vector<2x64xf32>
    %325 = vector.extract_strided_slice %323 {offsets = [0, 0], sizes = [2, 64], strides = [1, 1]} : vector<2x128xf32> to vector<2x64xf32>
    %326 = arith.addf %324, %325 : vector<2x64xf32>
    %327 = arith.negf %326 : vector<2x64xf32>
    %328 = math.exp %327 : vector<2x64xf32>
    %cst_63 = arith.constant 1.000000e+00 : f32
    %329 = vector.broadcast %cst_63 : f32 to vector<2x64xf32>
    %330 = arith.addf %329, %328 : vector<2x64xf32>
    %331 = arith.divf %329, %330 : vector<2x64xf32>
    %332 = vector.extract_strided_slice %331 {offsets = [0, 0], sizes = [2, 32], strides = [1, 1]} : vector<2x64xf32> to vector<2x32xf32>
    %333 = vector.extract_strided_slice %331 {offsets = [0, 32], sizes = [2, 32], strides = [1, 1]} : vector<2x64xf32> to vector<2x32xf32>
    %334 = vector.extract_strided_slice %282 {offsets = [0, 64], sizes = [2, 32], strides = [1, 1]} : vector<2x128xf32> to vector<2x32xf32>
    %335 = vector.extract_strided_slice %323 {offsets = [0, 64], sizes = [2, 32], strides = [1, 1]} : vector<2x128xf32> to vector<2x32xf32>
    %336 = arith.mulf %332, %335 : vector<2x32xf32>
    %337 = arith.addf %334, %336 : vector<2x32xf32>
    %338 = math.tanh %337 : vector<2x32xf32>
    %339 = arith.subf %321, %338 : vector<2x32xf32>
    %340 = arith.mulf %333, %339 : vector<2x32xf32>
    %341 = arith.addf %338, %340 : vector<2x32xf32>
    %cst_64 = arith.constant dense<0.000000e+00> : vector<2x128xf32>
    %342 = tpu.matmul %341, %269, %cst_64 {dimension_numbers = #tpu.dot_dimension_numbers<[1], [0], [0], [1], [0, 0, 1, 1], [], []>} : vector<2x32xf32>, vector<32x128xf32>, vector<2x128xf32> -> vector<2x128xf32>
    %343 = arith.addf %342, %272 : vector<2x128xf32>
    %344 = vector.extract_strided_slice %285 {offsets = [0, 0], sizes = [2, 64], strides = [1, 1]} : vector<2x128xf32> to vector<2x64xf32>
    %345 = vector.extract_strided_slice %343 {offsets = [0, 0], sizes = [2, 64], strides = [1, 1]} : vector<2x128xf32> to vector<2x64xf32>
    %346 = arith.addf %344, %345 : vector<2x64xf32>
    %347 = arith.negf %346 : vector<2x64xf32>
    %348 = math.exp %347 : vector<2x64xf32>
    %cst_65 = arith.constant 1.000000e+00 : f32
    %349 = vector.broadcast %cst_65 : f32 to vector<2x64xf32>
    %350 = arith.addf %349, %348 : vector<2x64xf32>
    %351 = arith.divf %349, %350 : vector<2x64xf32>
    %352 = vector.extract_strided_slice %351 {offsets = [0, 0], sizes = [2, 32], strides = [1, 1]} : vector<2x64xf32> to vector<2x32xf32>
    %353 = vector.extract_strided_slice %351 {offsets = [0, 32], sizes = [2, 32], strides = [1, 1]} : vector<2x64xf32> to vector<2x32xf32>
    %354 = vector.extract_strided_slice %285 {offsets = [0, 64], sizes = [2, 32], strides = [1, 1]} : vector<2x128xf32> to vector<2x32xf32>
    %355 = vector.extract_strided_slice %343 {offsets = [0, 64], sizes = [2, 32], strides = [1, 1]} : vector<2x128xf32> to vector<2x32xf32>
    %356 = arith.mulf %352, %355 : vector<2x32xf32>
    %357 = arith.addf %354, %356 : vector<2x32xf32>
    %358 = math.tanh %357 : vector<2x32xf32>
    %359 = arith.subf %341, %358 : vector<2x32xf32>
    %360 = arith.mulf %353, %359 : vector<2x32xf32>
    %361 = arith.addf %358, %360 : vector<2x32xf32>
    %cst_66 = arith.constant dense<0.000000e+00> : vector<2x128xf32>
    %362 = tpu.matmul %361, %269, %cst_66 {dimension_numbers = #tpu.dot_dimension_numbers<[1], [0], [0], [1], [0, 0, 1, 1], [], []>} : vector<2x32xf32>, vector<32x128xf32>, vector<2x128xf32> -> vector<2x128xf32>
    %363 = arith.addf %362, %272 : vector<2x128xf32>
    %364 = vector.extract_strided_slice %288 {offsets = [0, 0], sizes = [2, 64], strides = [1, 1]} : vector<2x128xf32> to vector<2x64xf32>
    %365 = vector.extract_strided_slice %363 {offsets = [0, 0], sizes = [2, 64], strides = [1, 1]} : vector<2x128xf32> to vector<2x64xf32>
    %366 = arith.addf %364, %365 : vector<2x64xf32>
    %367 = arith.negf %366 : vector<2x64xf32>
    %368 = math.exp %367 : vector<2x64xf32>
    %cst_67 = arith.constant 1.000000e+00 : f32
    %369 = vector.broadcast %cst_67 : f32 to vector<2x64xf32>
    %370 = arith.addf %369, %368 : vector<2x64xf32>
    %371 = arith.divf %369, %370 : vector<2x64xf32>
    %372 = vector.extract_strided_slice %371 {offsets = [0, 0], sizes = [2, 32], strides = [1, 1]} : vector<2x64xf32> to vector<2x32xf32>
    %373 = vector.extract_strided_slice %371 {offsets = [0, 32], sizes = [2, 32], strides = [1, 1]} : vector<2x64xf32> to vector<2x32xf32>
    %374 = vector.extract_strided_slice %288 {offsets = [0, 64], sizes = [2, 32], strides = [1, 1]} : vector<2x128xf32> to vector<2x32xf32>
    %375 = vector.extract_strided_slice %363 {offsets = [0, 64], sizes = [2, 32], strides = [1, 1]} : vector<2x128xf32> to vector<2x32xf32>
    %376 = arith.mulf %372, %375 : vector<2x32xf32>
    %377 = arith.addf %374, %376 : vector<2x32xf32>
    %378 = math.tanh %377 : vector<2x32xf32>
    %379 = arith.subf %361, %378 : vector<2x32xf32>
    %380 = arith.mulf %373, %379 : vector<2x32xf32>
    %381 = arith.addf %378, %380 : vector<2x32xf32>
    %cst_68 = arith.constant dense<0.000000e+00> : vector<2x128xf32>
    %382 = tpu.matmul %381, %269, %cst_68 {dimension_numbers = #tpu.dot_dimension_numbers<[1], [0], [0], [1], [0, 0, 1, 1], [], []>} : vector<2x32xf32>, vector<32x128xf32>, vector<2x128xf32> -> vector<2x128xf32>
    %383 = arith.addf %382, %272 : vector<2x128xf32>
    %384 = vector.extract_strided_slice %291 {offsets = [0, 0], sizes = [2, 64], strides = [1, 1]} : vector<2x128xf32> to vector<2x64xf32>
    %385 = vector.extract_strided_slice %383 {offsets = [0, 0], sizes = [2, 64], strides = [1, 1]} : vector<2x128xf32> to vector<2x64xf32>
    %386 = arith.addf %384, %385 : vector<2x64xf32>
    %387 = arith.negf %386 : vector<2x64xf32>
    %388 = math.exp %387 : vector<2x64xf32>
    %cst_69 = arith.constant 1.000000e+00 : f32
    %389 = vector.broadcast %cst_69 : f32 to vector<2x64xf32>
    %390 = arith.addf %389, %388 : vector<2x64xf32>
    %391 = arith.divf %389, %390 : vector<2x64xf32>
    %392 = vector.extract_strided_slice %391 {offsets = [0, 0], sizes = [2, 32], strides = [1, 1]} : vector<2x64xf32> to vector<2x32xf32>
    %393 = vector.extract_strided_slice %391 {offsets = [0, 32], sizes = [2, 32], strides = [1, 1]} : vector<2x64xf32> to vector<2x32xf32>
    %394 = vector.extract_strided_slice %291 {offsets = [0, 64], sizes = [2, 32], strides = [1, 1]} : vector<2x128xf32> to vector<2x32xf32>
    %395 = vector.extract_strided_slice %383 {offsets = [0, 64], sizes = [2, 32], strides = [1, 1]} : vector<2x128xf32> to vector<2x32xf32>
    %396 = arith.mulf %392, %395 : vector<2x32xf32>
    %397 = arith.addf %394, %396 : vector<2x32xf32>
    %398 = math.tanh %397 : vector<2x32xf32>
    %399 = arith.subf %381, %398 : vector<2x32xf32>
    %400 = arith.mulf %393, %399 : vector<2x32xf32>
    %401 = arith.addf %398, %400 : vector<2x32xf32>
    %cst_70 = arith.constant dense<0.000000e+00> : vector<2x128xf32>
    %402 = tpu.matmul %401, %269, %cst_70 {dimension_numbers = #tpu.dot_dimension_numbers<[1], [0], [0], [1], [0, 0, 1, 1], [], []>} : vector<2x32xf32>, vector<32x128xf32>, vector<2x128xf32> -> vector<2x128xf32>
    %403 = arith.addf %402, %272 : vector<2x128xf32>
    %404 = vector.extract_strided_slice %294 {offsets = [0, 0], sizes = [2, 64], strides = [1, 1]} : vector<2x128xf32> to vector<2x64xf32>
    %405 = vector.extract_strided_slice %403 {offsets = [0, 0], sizes = [2, 64], strides = [1, 1]} : vector<2x128xf32> to vector<2x64xf32>
    %406 = arith.addf %404, %405 : vector<2x64xf32>
    %407 = arith.negf %406 : vector<2x64xf32>
    %408 = math.exp %407 : vector<2x64xf32>
    %cst_71 = arith.constant 1.000000e+00 : f32
    %409 = vector.broadcast %cst_71 : f32 to vector<2x64xf32>
    %410 = arith.addf %409, %408 : vector<2x64xf32>
    %411 = arith.divf %409, %410 : vector<2x64xf32>
    %412 = vector.extract_strided_slice %411 {offsets = [0, 0], sizes = [2, 32], strides = [1, 1]} : vector<2x64xf32> to vector<2x32xf32>
    %413 = vector.extract_strided_slice %411 {offsets = [0, 32], sizes = [2, 32], strides = [1, 1]} : vector<2x64xf32> to vector<2x32xf32>
    %414 = vector.extract_strided_slice %294 {offsets = [0, 64], sizes = [2, 32], strides = [1, 1]} : vector<2x128xf32> to vector<2x32xf32>
    %415 = vector.extract_strided_slice %403 {offsets = [0, 64], sizes = [2, 32], strides = [1, 1]} : vector<2x128xf32> to vector<2x32xf32>
    %416 = arith.mulf %412, %415 : vector<2x32xf32>
    %417 = arith.addf %414, %416 : vector<2x32xf32>
    %418 = math.tanh %417 : vector<2x32xf32>
    %419 = arith.subf %401, %418 : vector<2x32xf32>
    %420 = arith.mulf %413, %419 : vector<2x32xf32>
    %421 = arith.addf %418, %420 : vector<2x32xf32>
    %cst_72 = arith.constant dense<0.000000e+00> : vector<2x128xf32>
    %422 = tpu.matmul %421, %269, %cst_72 {dimension_numbers = #tpu.dot_dimension_numbers<[1], [0], [0], [1], [0, 0, 1, 1], [], []>} : vector<2x32xf32>, vector<32x128xf32>, vector<2x128xf32> -> vector<2x128xf32>
    %423 = arith.addf %422, %272 : vector<2x128xf32>
    %424 = vector.extract_strided_slice %297 {offsets = [0, 0], sizes = [2, 64], strides = [1, 1]} : vector<2x128xf32> to vector<2x64xf32>
    %425 = vector.extract_strided_slice %423 {offsets = [0, 0], sizes = [2, 64], strides = [1, 1]} : vector<2x128xf32> to vector<2x64xf32>
    %426 = arith.addf %424, %425 : vector<2x64xf32>
    %427 = arith.negf %426 : vector<2x64xf32>
    %428 = math.exp %427 : vector<2x64xf32>
    %cst_73 = arith.constant 1.000000e+00 : f32
    %429 = vector.broadcast %cst_73 : f32 to vector<2x64xf32>
    %430 = arith.addf %429, %428 : vector<2x64xf32>
    %431 = arith.divf %429, %430 : vector<2x64xf32>
    %432 = vector.extract_strided_slice %431 {offsets = [0, 0], sizes = [2, 32], strides = [1, 1]} : vector<2x64xf32> to vector<2x32xf32>
    %433 = vector.extract_strided_slice %431 {offsets = [0, 32], sizes = [2, 32], strides = [1, 1]} : vector<2x64xf32> to vector<2x32xf32>
    %434 = vector.extract_strided_slice %297 {offsets = [0, 64], sizes = [2, 32], strides = [1, 1]} : vector<2x128xf32> to vector<2x32xf32>
    %435 = vector.extract_strided_slice %423 {offsets = [0, 64], sizes = [2, 32], strides = [1, 1]} : vector<2x128xf32> to vector<2x32xf32>
    %436 = arith.mulf %432, %435 : vector<2x32xf32>
    %437 = arith.addf %434, %436 : vector<2x32xf32>
    %438 = math.tanh %437 : vector<2x32xf32>
    %439 = arith.subf %421, %438 : vector<2x32xf32>
    %440 = arith.mulf %433, %439 : vector<2x32xf32>
    %441 = arith.addf %438, %440 : vector<2x32xf32>
    %cst_74 = arith.constant dense<0.000000e+00> : vector<2x128xf32>
    %442 = tpu.matmul %441, %269, %cst_74 {dimension_numbers = #tpu.dot_dimension_numbers<[1], [0], [0], [1], [0, 0, 1, 1], [], []>} : vector<2x32xf32>, vector<32x128xf32>, vector<2x128xf32> -> vector<2x128xf32>
    %443 = arith.addf %442, %272 : vector<2x128xf32>
    %444 = vector.extract_strided_slice %300 {offsets = [0, 0], sizes = [2, 64], strides = [1, 1]} : vector<2x128xf32> to vector<2x64xf32>
    %445 = vector.extract_strided_slice %443 {offsets = [0, 0], sizes = [2, 64], strides = [1, 1]} : vector<2x128xf32> to vector<2x64xf32>
    %446 = arith.addf %444, %445 : vector<2x64xf32>
    %447 = arith.negf %446 : vector<2x64xf32>
    %448 = math.exp %447 : vector<2x64xf32>
    %cst_75 = arith.constant 1.000000e+00 : f32
    %449 = vector.broadcast %cst_75 : f32 to vector<2x64xf32>
    %450 = arith.addf %449, %448 : vector<2x64xf32>
    %451 = arith.divf %449, %450 : vector<2x64xf32>
    %452 = vector.extract_strided_slice %451 {offsets = [0, 0], sizes = [2, 32], strides = [1, 1]} : vector<2x64xf32> to vector<2x32xf32>
    %453 = vector.extract_strided_slice %451 {offsets = [0, 32], sizes = [2, 32], strides = [1, 1]} : vector<2x64xf32> to vector<2x32xf32>
    %454 = vector.extract_strided_slice %300 {offsets = [0, 64], sizes = [2, 32], strides = [1, 1]} : vector<2x128xf32> to vector<2x32xf32>
    %455 = vector.extract_strided_slice %443 {offsets = [0, 64], sizes = [2, 32], strides = [1, 1]} : vector<2x128xf32> to vector<2x32xf32>
    %456 = arith.mulf %452, %455 : vector<2x32xf32>
    %457 = arith.addf %454, %456 : vector<2x32xf32>
    %458 = math.tanh %457 : vector<2x32xf32>
    %459 = arith.subf %441, %458 : vector<2x32xf32>
    %460 = arith.mulf %453, %459 : vector<2x32xf32>
    %461 = arith.addf %458, %460 : vector<2x32xf32>
    %462 = tpu.concatenate %262, %461 in 1 : vector<2x32xf32>, vector<2x32xf32> -> vector<2x64xf32>
    %c24 = arith.constant 24 : index
    %c0_76 = arith.constant 0 : index
    %463 = vector.load %arg2[%c24, %c0_76] : memref<232x256xf32, #tpu.memory_space<vmem>>, vector<64x32xf32>
    %cst_77 = arith.constant dense<0.000000e+00> : vector<2x32xf32>
    %464 = tpu.matmul %462, %463, %cst_77 {dimension_numbers = #tpu.dot_dimension_numbers<[1], [0], [0], [1], [0, 0, 1, 1], [], []>} : vector<2x64xf32>, vector<64x32xf32>, vector<2x32xf32> -> vector<2x32xf32>
    %c88 = arith.constant 88 : index
    %c0_78 = arith.constant 0 : index
    %465 = vector.load %arg2[%c88, %c0_78] : memref<232x256xf32, #tpu.memory_space<vmem>>, vector<1x32xf32>
    %466 = vector.broadcast %465 : vector<1x32xf32> to vector<2x32xf32>
    %467 = arith.addf %464, %466 : vector<2x32xf32>
    %cst_79 = arith.constant 0.000000e+00 : f32
    %468 = vector.broadcast %cst_79 : f32 to vector<2x32xf32>
    %469 = arith.maximumf %467, %468 : vector<2x32xf32>
    %c0_80 = arith.constant 0 : index
    %c0_81 = arith.constant 0 : index
    %470 = vector.load %arg3[%c0_80, %c0_81] : memref<2x32xf32, #tpu.memory_space<vmem>>, vector<2x32xf32>
    tpu.vector_store %arg3[%c0_80, %c0_81], %469 {strides = array<i32>} : memref<2x32xf32, #tpu.memory_space<vmem>>, vector<2x32xf32>,
    return
  }
}

</mosaic_0001>

<llo_original>
// kernel: _forward_impl.1
$region0: #{_forward_impl.1}
  #allocation0 [shape = 'u32[]', space=smem, size = 0x4, offset = 0x4, fixed_abs, tag = 'smem constant byte address 0x4 - core index']
  #allocation1 [shape = 'u32[72,128]{1,0:T(1,128)}', space=vmem, size = 0x9000, scoped, tag = 'internal scratch']
  #allocation2 [shape = 'f32[16,32]{1,0:T(8,128)}', space=vmem, size = 0x2000, scoped, tag = 'scratch operand']
  %s0 = inlined_call_operand.hbm [shape: f32[2,12], index: 0, kind: input, shape index: {}]
  %s1 = inlined_call_operand.hbm [shape: f32[16,8], index: 1, kind: input, shape index: {}]
  %s2 = inlined_call_operand.hbm [shape: f32[232,256], index: 2, kind: input, shape index: {}]
  %s3 = inlined_call_operand.hbm [shape: f32[2,32], index: 3, kind: output, shape index: {}]
  %s4 = sld [smem:[#allocation0]]
  $region34: #{_forward_impl.1} parent=0
    _
  %s6 = ssub.s32 1, %s4
  %s7 = scalar_select 0, %s6, %s4
  $region1: #{_forward_impl.1} parent=0
    #allocation3 [shape = 'u8[1024]{0}', space=vmem, size = 0x400, scoped, tag = 'input window, operand 0, single buffered']
    #allocation4 [shape = 's32[1]{0}', space=sflag, size = 0x4, scoped, tag = 'scoped memory for _forward_impl.1']
    #allocation5 [shape = 's32[1]{0}', space=sflag, size = 0x4, scoped, tag = 'scoped memory for _forward_impl.1']
    #allocation6 [shape = 'u8[8192]{0}', space=vmem, size = 0x2000, scoped, tag = 'input window, operand 1, single buffered']
    #allocation7 [shape = 's32[1]{0}', space=sflag, size = 0x4, scoped, tag = 'scoped memory for _forward_impl.1']
    #allocation8 [shape = 'u8[237568]{0}', space=vmem, size = 0x3a000, scoped, tag = 'input window, operand 2, single buffered']
    #allocation9 [shape = 'u8[1024]{0}', space=vmem, size = 0x400, scoped, tag = 'output window, operand 0, single buffered']
    %8 = vsyncpa [#allocation4], 0
    %9 = vsyncpa [#allocation7], 0
    %10 = vsyncpa [#allocation5], 0
    // Predicated region
    $region2: #{_forward_impl.1} parent=1 // pred_check
      _
    $region3: #{_forward_impl.1} parent=1 // pred_check_branch
      %12 = sbr.rel (0) target = $region5
    $region4: #{_forward_impl.1} parent=1 // pred_region
      %14 = vsyncadd [#allocation4], 0
      %s16 = sshll.u32 %s0, 4
      %s17 = int_to_ptr.hbm [resolvable:$true] %s16
      %s18 = sshll.u32 [#allocation3], 4
      %s19 = int_to_ptr.vmem [resolvable:$true] %s18
      %21 = dma.hbm_to_vmem [thread:$0]  %s17, 32, %s19, [#allocation4]
    $region5: #{_forward_impl.1} parent=1 // pred_fallthru
      _
    // Predicated region
    $region6: #{_forward_impl.1} parent=1 // pred_check
      _
    $region7: #{_forward_impl.1} parent=1 // pred_check_branch
      %23 = sbr.rel (0) target = $region9
    $region8: #{_forward_impl.1} parent=1 // pred_region
      %25 = vsyncadd [#allocation7], 0
      %s26 = sshll.u32 %s1, 4
      %s27 = int_to_ptr.hbm [resolvable:$true] %s26
      %s28 = sshll.u32 [#allocation6], 4
      %s29 = int_to_ptr.vmem [resolvable:$true] %s28
      %34 = dma.hbm_to_vmem [thread:$0]  %s27, 256, %s29, [#allocation7], 128, 128, 8
    $region9: #{_forward_impl.1} parent=1 // pred_fallthru
      _
    // Predicated region
    $region10: #{_forward_impl.1} parent=1 // pred_check
      _
    $region11: #{_forward_impl.1} parent=1 // pred_check_branch
      %36 = sbr.rel (0) target = $region13
    $region12: #{_forward_impl.1} parent=1 // pred_region
      %38 = vsyncadd [#allocation7], 0
      %s39 = sshll.u32 %s2, 4
      %s40 = int_to_ptr.hbm [resolvable:$true] %s39
      %s41 = sshll.u32 [#allocation8], 4
      %s42 = int_to_ptr.vmem [resolvable:$true] %s41
      %47 = dma.hbm_to_vmem [thread:$0]  %s40, 7424, %s42, [#allocation7], 256, 256, 16
    $region13: #{_forward_impl.1} parent=1 // pred_fallthru
      _
    // Predicated region
    $region14: #{_forward_impl.1} parent=1 // pred_check
      _
    $region15: #{_forward_impl.1} parent=1 // pred_check_branch
      %49 = sbr.rel (0) target = $region17
    $region16: #{_forward_impl.1} parent=1 // pred_region
      %51 = dma.done [#allocation4], 32
    $region17: #{_forward_impl.1} parent=1 // pred_fallthru
      _
    // Predicated region
    $region18: #{_forward_impl.1} parent=1 // pred_check
      _
    $region19: #{_forward_impl.1} parent=1 // pred_check_branch
      %53 = sbr.rel (0) target = $region21
    $region20: #{_forward_impl.1} parent=1 // pred_region
      %55 = dma.done [#allocation7], 256
    $region21: #{_forward_impl.1} parent=1 // pred_fallthru
      _
    // Predicated region
    $region22: #{_forward_impl.1} parent=1 // pred_check
      _
    $region23: #{_forward_impl.1} parent=1 // pred_check_branch
      %57 = sbr.rel (0) target = $region25
    $region24: #{_forward_impl.1} parent=1 // pred_region
      %59 = dma.done [#allocation7], 7424
    $region25: #{_forward_impl.1} parent=1 // pred_fallthru
      _
    %v60 = vld [vmem:[#allocation3] sm:$0x3]
    %v61 = vld [vmem:[#allocation8] sm:$0xff]
    %v62 = vld [vmem:[#allocation8 + $0x10] sm:$0xf]
    %v63 = vld [vmem:[#allocation8 + $0x20] ss:$0 sm:$0xff]
    %vm64 = vcmask 97280
    %v66 = vsel %vm64, %v60, 0
    %vm68 = vcmask 1043456
    %v70 = vsel %vm68, %v62, 0
    %72 = vmatpush.msra.mxu0 0.0
    %73 = vmatpush.msra.mxu0 0.0
    %74 = vmatpush.msra.mxu0 0.0
    %75 = vmatpush.msra.mxu0 0.0
    %76 = vmatpush.msra.mxu0 0.0
    %77 = vmatpush.msra.mxu0 0.0
    %78 = vmatpush.msra.mxu0 0.0
    %79 = vmatpush.msra.mxu0 0.0
    %80 = vmatpush.msra.mxu0 0.0
    %81 = vmatpush.msra.mxu0 0.0
    %82 = vmatpush.msra.mxu0 0.0
    %83 = vmatpush.msra.mxu0 0.0
    %84 = vmatpush.msra.mxu0 0.0
    %85 = vmatpush.msra.mxu0 0.0
    %86 = vmatpush.msra.mxu0 %v70
    %87 = vmatpush.msra.mxu0 %v61
    %88 = vmatmul.f32.gmra.mxu0 %v66
    %v89 = vpop.f32.mrf.mxu0
    %v90 = vadd.f32 %v63, %v89
    %91 = vdwg.mxu0
    %v92 = vmax.f32 %v90, 0.0
    %v93 = vld [vmem:[#allocation8 + $0xc0] sm:$0xff]
    %v94 = vld [vmem:[#allocation8 + $0xc8] sm:$0xff]
    %s95 = scalar_lea.vmem [#allocation8], 208
    %v96 = vld [vmem:[%s95] ss:$8 sm:$0x3]
    %v97 = vld [vmem:[#allocation8 + $0xe0] sm:$0xff]
    %v98 = vld [vmem:[#allocation8 + $0xf0] sm:$0xff]
    %v99 = vld [vmem:[#allocation8 + $0x100] sm:$0xff]
    %v100 = vld [vmem:[#allocation8 + $0x110] sm:$0xff]
    %v101 = vld [vmem:[#allocation8 + $0x120] ss:$0 sm:$0xff]
    %v102 = vld [vmem:[#allocation6] sm:$0xff]
    %v103 = vld [vmem:[#allocation6 + $0x8] sm:$0xff]
    %v105 = vperm.slane %v96, 0
    %v106 = vperm.slane %v96, 1
    %vm109 = vcmask 64512
    %v111 = vsel %vm109, %v102, 0
    %v114 = vsel %vm109, %v103, 0
    %116 = vmatpush.msra.mxu0 0.0
    %117 = vmatpush.msra.mxu0 0.0
    %118 = vmatpush.msra.mxu0 0.0
    %119 = vmatpush.msra.mxu0 0.0
    %120 = vmatpush.msra.mxu0 0.0
    %121 = vmatpush.msra.mxu0 0.0
    %122 = vmatpush.msra.mxu0 0.0
    %123 = vmatpush.msra.mxu0 0.0
    %124 = vmatpush.msra.mxu0 0.0
    %125 = vmatpush.msra.mxu0 0.0
    %126 = vmatpush.msra.mxu0 0.0
    %127 = vmatpush.msra.mxu0 0.0
    %128 = vmatpush.msra.mxu0 0.0
    %129 = vmatpush.msra.mxu0 0.0
    %130 = vmatpush.msra.mxu0 0.0
    %131 = vmatpush.msra.mxu0 %v93
    %132 = vmatmul.f32.gmra.mxu0 %v111
    %v133 = vpop.f32.mrf.mxu0
    %v134 = vadd.f32 %v105, %v133
    %135 = vmatmul.f32.gmra.mxu0 %v114
    %v136 = vpop.f32.mrf.mxu0
    %v137 = vadd.f32 %v105, %v136
    %138 = vdwg.mxu0
    %139 = vmatpush.msra.mxu0 0.0
    %140 = vmatpush.msra.mxu0 0.0
    %141 = vmatpush.msra.mxu0 0.0
    %142 = vmatpush.msra.mxu0 0.0
    %143 = vmatpush.msra.mxu0 0.0
    %144 = vmatpush.msra.mxu0 0.0
    %145 = vmatpush.msra.mxu0 0.0
    %146 = vmatpush.msra.mxu0 0.0
    %147 = vmatpush.msra.mxu0 0.0
    %148 = vmatpush.msra.mxu0 0.0
    %149 = vmatpush.msra.mxu0 0.0
    %150 = vmatpush.msra.mxu0 0.0
    %151 = vmatpush.msra.mxu0 0.0
    %152 = vmatpush.msra.mxu0 0.0
    %153 = vmatpush.msra.mxu0 0.0
    %154 = vmatpush.msra.mxu0 %v94
    %155 = vmatmul.f32.gmra.mxu0 %v111
    %v156 = vpop.f32.mrf.mxu0
    %v157 = vadd.f32 %v106, %v156
    %158 = vmatmul.f32.gmra.mxu0 %v114
    %v159 = vpop.f32.mrf.mxu0
    %v160 = vadd.f32 %v106, %v159
    %161 = vdwg.mxu0
    %v163 = vrot.slane %v137, 7
    %vm165 = vcmask 1040384
    %v166 = vsel %vm165, %v134, %v163
    %v168 = vrot.slane %v157, 7
    %v171 = vrot.slane %v160, 6
    %v173 = vsel %vm165, %v168, %v171
    %v174 = vadd.f32 %v166, %v173
    %v176 = vrot.slane %v134, 1
    %v178 = vsel %vm165, %v176, %v137
    %v179 = vrot.slane %v157, 6
    %v181 = vrot.slane %v160, 5
    %v183 = vsel %vm165, %v179, %v181
    %v184 = vadd.f32 %v178, %v183
    %v185 = vrot.slane %v134, 2
    %v187 = vrot.slane %v137, 1
    %v189 = vsel %vm165, %v185, %v187
    %v190 = vrot.slane %v157, 5
    %v192 = vrot.slane %v160, 4
    %v194 = vsel %vm165, %v190, %v192
    %v195 = vadd.f32 %v189, %v194
    %v196 = vrot.slane %v134, 3
    %v198 = vrot.slane %v137, 2
    %v200 = vsel %vm165, %v196, %v198
    %v201 = vrot.slane %v157, 4
    %v203 = vrot.slane %v160, 3
    %v205 = vsel %vm165, %v201, %v203
    %v206 = vadd.f32 %v200, %v205
    %v207 = vrot.slane %v134, 4
    %v209 = vrot.slane %v137, 3
    %v211 = vsel %vm165, %v207, %v209
    %v212 = vrot.slane %v157, 3
    %v214 = vrot.slane %v160, 2
    %v216 = vsel %vm165, %v212, %v214
    %v217 = vadd.f32 %v211, %v216
    %v218 = vrot.slane %v134, 5
    %v220 = vrot.slane %v137, 4
    %v222 = vsel %vm165, %v218, %v220
    %v223 = vrot.slane %v157, 2
    %v225 = vrot.slane %v160, 1
    %v227 = vsel %vm165, %v223, %v225
    %v228 = vadd.f32 %v222, %v227
    %v229 = vrot.slane %v134, 6
    %v231 = vrot.slane %v137, 5
    %v233 = vsel %vm165, %v229, %v231
    %v234 = vrot.slane %v157, 1
    %v236 = vsel %vm165, %v234, %v160
    %v237 = vadd.f32 %v233, %v236
    %v238 = vrot.slane %v134, 7
    %v240 = vrot.slane %v137, 6
    %v242 = vsel %vm165, %v238, %v240
    %v243 = vrot.slane %v160, 7
    %v245 = vsel %vm165, %v157, %v243
    %v246 = vadd.f32 %v242, %v245
    %vm247 = vcmask 261120
    %v249 = vsel %vm247, %v92, 0
    %251 = vmatpush.msra.mxu0 0.0
    %252 = vmatpush.msra.mxu0 0.0
    %253 = vmatpush.msra.mxu0 0.0
    %254 = vmatpush.msra.mxu0 0.0
    %255 = vmatpush.msra.mxu0 0.0
    %256 = vmatpush.msra.mxu0 0.0
    %257 = vmatpush.msra.mxu0 0.0
    %258 = vmatpush.msra.mxu0 0.0
    %259 = vmatpush.msra.mxu0 0.0
    %260 = vmatpush.msra.mxu0 0.0
    %261 = vmatpush.msra.mxu0 0.0
    %262 = vmatpush.msra.mxu0 0.0
    %263 = vmatpush.msra.mxu0 %v100
    %264 = vmatpush.msra.mxu0 %v99
    %265 = vmatpush.msra.mxu0 %v98
    %266 = vmatpush.msra.mxu0 %v97
    %267 = vmatmul.f32.gmra.mxu0 %v249
    %v268 = vpop.f32.mrf.mxu0
    %v269 = vadd.f32 %v101, %v268
    %270 = vdwg.mxu0
    %v271 = vadd.f32 %v174, %v269
    %v272 = vxor.u32 %v271, 2147483648
    %v273 = vmul.f32 %v272, 1.442695
    %v274 = vpow.pop %v273
    %v275 = vadd.f32 %v274, 1.0
    %v276 = vrcp.pop %v275
    %v277 = vmul.f32 %v275, %v276
    %v278 = vsub.f32 1.0, %v277
    %v279 = vmul.f32 %v276, %v278
    %v280 = vadd.f32 %v276, %v279
    %vm281 = vweird.f32 %v275
    %vm282 = vweird.f32 %v276
    %vm283 = vmor %vm281, %vm282
    %v284 = vsel %vm283, %v276, %v280
    %v285 = vand.u32 2147483647, %v275
    %vm286 = vcmp.eq.f32.partialorder %v285, 8.507059e+37
    %v287 = vand.u32 %v275, 2147483648
    %v288 = vor.u32 1.1754944e-38, %v287
    %v289 = vsel %vm286, %v288, %v284
    %v290 = vmul.f32 1.0, %v289
    %292 = vrot.lane.b32.xlu0 %v269, 64
    %v293 = vpop.permute.xlu0 %292
    %v295 = vmul.f32 %v290, %v293
    %297 = vrot.lane.b32.xlu0 %v295, 64
    %v298 = vpop.permute.xlu0 %297
    %v300 = vadd.f32 %v174, %v298
    %v301 = vtanh.pop %v300
    %303 = vrot.lane.b32.xlu0 %v301, 64
    %v304 = vpop.permute.xlu0 %303
    %v306 = vsub.f32 %v92, %v304
    %308 = vrot.lane.b32.xlu0 %v306, 32
    %v309 = vpop.permute.xlu0 %308
    %v311 = vmul.f32 %v290, %v309
    %313 = vrot.lane.b32.xlu0 %v311, 32
    %v314 = vpop.permute.xlu0 %313
    %v316 = vadd.f32 %v301, %v314
    %318 = vrot.lane.b32.xlu0 %v316, 64
    %v319 = vpop.permute.xlu0 %318
    %vm321 = vcmask 123904
    %322 = vst.msk [vmem:[#allocation2] sm:$0x3] %vm321, %v319
    %vm323 = vcmask 255104
    %324 = vst.msk [vmem:[#allocation2 + $0xe] sm:$0x3] %vm323, %v319
    %v325 = vsel %vm247, %v319, 0
    %327 = vmatpush.msra.mxu0 0.0
    %328 = vmatpush.msra.mxu0 0.0
    %329 = vmatpush.msra.mxu0 0.0
    %330 = vmatpush.msra.mxu0 0.0
    %331 = vmatpush.msra.mxu0 0.0
    %332 = vmatpush.msra.mxu0 0.0
    %333 = vmatpush.msra.mxu0 0.0
    %334 = vmatpush.msra.mxu0 0.0
    %335 = vmatpush.msra.mxu0 0.0
    %336 = vmatpush.msra.mxu0 0.0
    %337 = vmatpush.msra.mxu0 0.0
    %338 = vmatpush.msra.mxu0 0.0
    %339 = vmatpush.msra.mxu0 %v100
    %340 = vmatpush.msra.mxu0 %v99
    %341 = vmatpush.msra.mxu0 %v98
    %342 = vmatpush.msra.mxu0 %v97
    %343 = vmatmul.f32.gmra.mxu0 %v325
    %v344 = vpop.f32.mrf.mxu0
    %v345 = vadd.f32 %v101, %v344
    %346 = vdwg.mxu0
    %v347 = vadd.f32 %v184, %v345
    %v348 = vxor.u32 %v347, 2147483648
    %v349 = vmul.f32 %v348, 1.442695
    %v350 = vpow.pop %v349
    %v351 = vadd.f32 %v350, 1.0
    %v352 = vrcp.pop %v351
    %v353 = vmul.f32 %v351, %v352
    %v354 = vsub.f32 1.0, %v353
    %v355 = vmul.f32 %v352, %v354
    %v356 = vadd.f32 %v352, %v355
    %vm357 = vweird.f32 %v351
    %vm358 = vweird.f32 %v352
    %vm359 = vmor %vm357, %vm358
    %v360 = vsel %vm359, %v352, %v356
    %v361 = vand.u32 2147483647, %v351
    %vm362 = vcmp.eq.f32.partialorder %v361, 8.507059e+37
    %v363 = vand.u32 %v351, 2147483648
    %v364 = vor.u32 1.1754944e-38, %v363
    %v365 = vsel %vm362, %v364, %v360
    %v366 = vmul.f32 1.0, %v365
    %368 = vrot.lane.b32.xlu0 %v345, 64
    %v369 = vpop.permute.xlu0 %368
    %v371 = vmul.f32 %v366, %v369
    %373 = vrot.lane.b32.xlu0 %v371, 64
    %v374 = vpop.permute.xlu0 %373
    %v376 = vadd.f32 %v184, %v374
    %v377 = vtanh.pop %v376
    %v378 = vsub.f32 %v316, %v377
    %380 = vrot.lane.b32.xlu0 %v378, 96
    %v381 = vpop.permute.xlu0 %380
    %v383 = vmul.f32 %v366, %v381
    %385 = vrot.lane.b32.xlu0 %v383, 32
    %v386 = vpop.permute.xlu0 %385
    %v388 = vadd.f32 %v377, %v386
    %390 = vrot.lane.b32.xlu0 %v388, 64
    %v391 = vpop.permute.xlu0 %390
    %393 = vst.msk [vmem:[#allocation2 + $0x2] sm:$0x3] %vm321, %v391
    %394 = vst.msk [vmem:[#allocation2 + $0xc] sm:$0x3] %vm323, %v391
    %v395 = vsel %vm247, %v391, 0
    %397 = vmatpush.msra.mxu0 0.0
    %398 = vmatpush.msra.mxu0 0.0
    %399 = vmatpush.msra.mxu0 0.0
    %400 = vmatpush.msra.mxu0 0.0
    %401 = vmatpush.msra.mxu0 0.0
    %402 = vmatpush.msra.mxu0 0.0
    %403 = vmatpush.msra.mxu0 0.0
    %404 = vmatpush.msra.mxu0 0.0
    %405 = vmatpush.msra.mxu0 0.0
    %406 = vmatpush.msra.mxu0 0.0
    %407 = vmatpush.msra.mxu0 0.0
    %408 = vmatpush.msra.mxu0 0.0
    %409 = vmatpush.msra.mxu0 %v100
    %410 = vmatpush.msra.mxu0 %v99
    %411 = vmatpush.msra.mxu0 %v98
    %412 = vmatpush.msra.mxu0 %v97
    %413 = vmatmul.f32.gmra.mxu0 %v395
    %v414 = vpop.f32.mrf.mxu0
    %v415 = vadd.f32 %v101, %v414
    %416 = vdwg.mxu0
    %v417 = vadd.f32 %v195, %v415
    %v418 = vxor.u32 %v417, 2147483648
    %v419 = vmul.f32 %v418, 1.442695
    %v420 = vpow.pop %v419
    %v421 = vadd.f32 %v420, 1.0
    %v422 = vrcp.pop %v421
    %v423 = vmul.f32 %v421, %v422
    %v424 = vsub.f32 1.0, %v423
    %v425 = vmul.f32 %v422, %v424
    %v426 = vadd.f32 %v422, %v425
    %vm427 = vweird.f32 %v421
    %vm428 = vweird.f32 %v422
    %vm429 = vmor %vm427, %vm428
    %v430 = vsel %vm429, %v422, %v426
    %v431 = vand.u32 2147483647, %v421
    %vm432 = vcmp.eq.f32.partialorder %v431, 8.507059e+37
    %v433 = vand.u32 %v421, 2147483648
    %v434 = vor.u32 1.1754944e-38, %v433
    %v435 = vsel %vm432, %v434, %v430
    %v436 = vmul.f32 1.0, %v435
    %438 = vrot.lane.b32.xlu0 %v415, 64
    %v439 = vpop.permute.xlu0 %438
    %v441 = vmul.f32 %v436, %v439
    %443 = vrot.lane.b32.xlu0 %v441, 64
    %v444 = vpop.permute.xlu0 %443
    %v446 = vadd.f32 %v195, %v444
    %v447 = vtanh.pop %v446
    %v448 = vsub.f32 %v388, %v447
    %450 = vrot.lane.b32.xlu0 %v448, 96
    %v451 = vpop.permute.xlu0 %450
    %v453 = vmul.f32 %v436, %v451
    %455 = vrot.lane.b32.xlu0 %v453, 32
    %v456 = vpop.permute.xlu0 %455
    %v458 = vadd.f32 %v447, %v456
    %460 = vrot.lane.b32.xlu0 %v458, 64
    %v461 = vpop.permute.xlu0 %460
    %463 = vst.msk [vmem:[#allocation2 + $0x4] sm:$0x3] %vm321, %v461
    %464 = vst.msk [vmem:[#allocation2 + $0xa] sm:$0x3] %vm323, %v461
    %v465 = vsel %vm247, %v461, 0
    %467 = vmatpush.msra.mxu0 0.0
    %468 = vmatpush.msra.mxu0 0.0
    %469 = vmatpush.msra.mxu0 0.0
    %470 = vmatpush.msra.mxu0 0.0
    %471 = vmatpush.msra.mxu0 0.0
    %472 = vmatpush.msra.mxu0 0.0
    %473 = vmatpush.msra.mxu0 0.0
    %474 = vmatpush.msra.mxu0 0.0
    %475 = vmatpush.msra.mxu0 0.0
    %476 = vmatpush.msra.mxu0 0.0
    %477 = vmatpush.msra.mxu0 0.0
    %478 = vmatpush.msra.mxu0 0.0
    %479 = vmatpush.msra.mxu0 %v100
    %480 = vmatpush.msra.mxu0 %v99
    %481 = vmatpush.msra.mxu0 %v98
    %482 = vmatpush.msra.mxu0 %v97
    %483 = vmatmul.f32.gmra.mxu0 %v465
    %v484 = vpop.f32.mrf.mxu0
    %v485 = vadd.f32 %v101, %v484
    %486 = vdwg.mxu0
    %v487 = vadd.f32 %v206, %v485
    %v488 = vxor.u32 %v487, 2147483648
    %v489 = vmul.f32 %v488, 1.442695
    %v490 = vpow.pop %v489
    %v491 = vadd.f32 %v490, 1.0
    %v492 = vrcp.pop %v491
    %v493 = vmul.f32 %v491, %v492
    %v494 = vsub.f32 1.0, %v493
    %v495 = vmul.f32 %v492, %v494
    %v496 = vadd.f32 %v492, %v495
    %vm497 = vweird.f32 %v491
    %vm498 = vweird.f32 %v492
    %vm499 = vmor %vm497, %vm498
    %v500 = vsel %vm499, %v492, %v496
    %v501 = vand.u32 2147483647, %v491
    %vm502 = vcmp.eq.f32.partialorder %v501, 8.507059e+37
    %v503 = vand.u32 %v491, 2147483648
    %v504 = vor.u32 1.1754944e-38, %v503
    %v505 = vsel %vm502, %v504, %v500
    %v506 = vmul.f32 1.0, %v505
    %508 = vrot.lane.b32.xlu0 %v485, 64
    %v509 = vpop.permute.xlu0 %508
    %v511 = vmul.f32 %v506, %v509
    %513 = vrot.lane.b32.xlu0 %v511, 64
    %v514 = vpop.permute.xlu0 %513
    %v516 = vadd.f32 %v206, %v514
    %v517 = vtanh.pop %v516
    %v518 = vsub.f32 %v458, %v517
    %520 = vrot.lane.b32.xlu0 %v518, 96
    %v521 = vpop.permute.xlu0 %520
    %v523 = vmul.f32 %v506, %v521
    %525 = vrot.lane.b32.xlu0 %v523, 32
    %v526 = vpop.permute.xlu0 %525
    %v528 = vadd.f32 %v517, %v526
    %530 = vrot.lane.b32.xlu0 %v528, 64
    %v531 = vpop.permute.xlu0 %530
    %533 = vst.msk [vmem:[#allocation2 + $0x6] sm:$0x3] %vm321, %v531
    %534 = vst.msk [vmem:[#allocation2 + $0x8] sm:$0x3] %vm323, %v531
    %v535 = vsel %vm247, %v531, 0
    %537 = vmatpush.msra.mxu0 0.0
    %538 = vmatpush.msra.mxu0 0.0
    %539 = vmatpush.msra.mxu0 0.0
    %540 = vmatpush.msra.mxu0 0.0
    %541 = vmatpush.msra.mxu0 0.0
    %542 = vmatpush.msra.mxu0 0.0
    %543 = vmatpush.msra.mxu0 0.0
    %544 = vmatpush.msra.mxu0 0.0
    %545 = vmatpush.msra.mxu0 0.0
    %546 = vmatpush.msra.mxu0 0.0
    %547 = vmatpush.msra.mxu0 0.0
    %548 = vmatpush.msra.mxu0 0.0
    %549 = vmatpush.msra.mxu0 %v100
    %550 = vmatpush.msra.mxu0 %v99
    %551 = vmatpush.msra.mxu0 %v98
    %552 = vmatpush.msra.mxu0 %v97
    %553 = vmatmul.f32.gmra.mxu0 %v535
    %v554 = vpop.f32.mrf.mxu0
    %v555 = vadd.f32 %v101, %v554
    %556 = vdwg.mxu0
    %v557 = vadd.f32 %v217, %v555
    %v558 = vxor.u32 %v557, 2147483648
    %v559 = vmul.f32 %v558, 1.442695
    %v560 = vpow.pop %v559
    %v561 = vadd.f32 %v560, 1.0
    %v562 = vrcp.pop %v561
    %v563 = vmul.f32 %v561, %v562
    %v564 = vsub.f32 1.0, %v563
    %v565 = vmul.f32 %v562, %v564
    %v566 = vadd.f32 %v562, %v565
    %vm567 = vweird.f32 %v561
    %vm568 = vweird.f32 %v562
    %vm569 = vmor %vm567, %vm568
    %v570 = vsel %vm569, %v562, %v566
    %v571 = vand.u32 2147483647, %v561
    %vm572 = vcmp.eq.f32.partialorder %v571, 8.507059e+37
    %v573 = vand.u32 %v561, 2147483648
    %v574 = vor.u32 1.1754944e-38, %v573
    %v575 = vsel %vm572, %v574, %v570
    %v576 = vmul.f32 1.0, %v575
    %578 = vrot.lane.b32.xlu0 %v555, 64
    %v579 = vpop.permute.xlu0 %578
    %v581 = vmul.f32 %v576, %v579
    %583 = vrot.lane.b32.xlu0 %v581, 64
    %v584 = vpop.permute.xlu0 %583
    %v586 = vadd.f32 %v217, %v584
    %v587 = vtanh.pop %v586
    %v588 = vsub.f32 %v528, %v587
    %590 = vrot.lane.b32.xlu0 %v588, 96
    %v591 = vpop.permute.xlu0 %590
    %v593 = vmul.f32 %v576, %v591
    %595 = vrot.lane.b32.xlu0 %v593, 32
    %v596 = vpop.permute.xlu0 %595
    %v598 = vadd.f32 %v587, %v596
    %600 = vrot.lane.b32.xlu0 %v598, 64
    %v601 = vpop.permute.xlu0 %600
    %603 = vst.msk [vmem:[#allocation2 + $0x8] sm:$0x3] %vm321, %v601
    %604 = vst.msk [vmem:[#allocation2 + $0x6] sm:$0x3] %vm323, %v601
    %v605 = vsel %vm247, %v601, 0
    %607 = vmatpush.msra.mxu0 0.0
    %608 = vmatpush.msra.mxu0 0.0
    %609 = vmatpush.msra.mxu0 0.0
    %610 = vmatpush.msra.mxu0 0.0
    %611 = vmatpush.msra.mxu0 0.0
    %612 = vmatpush.msra.mxu0 0.0
    %613 = vmatpush.msra.mxu0 0.0
    %614 = vmatpush.msra.mxu0 0.0
    %615 = vmatpush.msra.mxu0 0.0
    %616 = vmatpush.msra.mxu0 0.0
    %617 = vmatpush.msra.mxu0 0.0
    %618 = vmatpush.msra.mxu0 0.0
    %619 = vmatpush.msra.mxu0 %v100
    %620 = vmatpush.msra.mxu0 %v99
    %621 = vmatpush.msra.mxu0 %v98
    %622 = vmatpush.msra.mxu0 %v97
    %623 = vmatmul.f32.gmra.mxu0 %v605
    %v624 = vpop.f32.mrf.mxu0
    %v625 = vadd.f32 %v101, %v624
    %626 = vdwg.mxu0
    %v627 = vadd.f32 %v228, %v625
    %v628 = vxor.u32 %v627, 2147483648
    %v629 = vmul.f32 %v628, 1.442695
    %v630 = vpow.pop %v629
    %v631 = vadd.f32 %v630, 1.0
    %v632 = vrcp.pop %v631
    %v633 = vmul.f32 %v631, %v632
    %v634 = vsub.f32 1.0, %v633
    %v635 = vmul.f32 %v632, %v634
    %v636 = vadd.f32 %v632, %v635
    %vm637 = vweird.f32 %v631
    %vm638 = vweird.f32 %v632
    %vm639 = vmor %vm637, %vm638
    %v640 = vsel %vm639, %v632, %v636
    %v641 = vand.u32 2147483647, %v631
    %vm642 = vcmp.eq.f32.partialorder %v641, 8.507059e+37
    %v643 = vand.u32 %v631, 2147483648
    %v644 = vor.u32 1.1754944e-38, %v643
    %v645 = vsel %vm642, %v644, %v640
    %v646 = vmul.f32 1.0, %v645
    %648 = vrot.lane.b32.xlu0 %v625, 64
    %v649 = vpop.permute.xlu0 %648
    %v651 = vmul.f32 %v646, %v649
    %653 = vrot.lane.b32.xlu0 %v651, 64
    %v654 = vpop.permute.xlu0 %653
    %v656 = vadd.f32 %v228, %v654
    %v657 = vtanh.pop %v656
    %v658 = vsub.f32 %v598, %v657
    %660 = vrot.lane.b32.xlu0 %v658, 96
    %v661 = vpop.permute.xlu0 %660
    %v663 = vmul.f32 %v646, %v661
    %665 = vrot.lane.b32.xlu0 %v663, 32
    %v666 = vpop.permute.xlu0 %665
    %v668 = vadd.f32 %v657, %v666
    %670 = vrot.lane.b32.xlu0 %v668, 64
    %v671 = vpop.permute.xlu0 %670
    %673 = vst.msk [vmem:[#allocation2 + $0xa] sm:$0x3] %vm321, %v671
    %674 = vst.msk [vmem:[#allocation2 + $0x4] sm:$0x3] %vm323, %v671
    %v675 = vsel %vm247, %v671, 0
    %677 = vmatpush.msra.mxu0 0.0
    %678 = vmatpush.msra.mxu0 0.0
    %679 = vmatpush.msra.mxu0 0.0
    %680 = vmatpush.msra.mxu0 0.0
    %681 = vmatpush.msra.mxu0 0.0
    %682 = vmatpush.msra.mxu0 0.0
    %683 = vmatpush.msra.mxu0 0.0
    %684 = vmatpush.msra.mxu0 0.0
    %685 = vmatpush.msra.mxu0 0.0
    %686 = vmatpush.msra.mxu0 0.0
    %687 = vmatpush.msra.mxu0 0.0
    %688 = vmatpush.msra.mxu0 0.0
    %689 = vmatpush.msra.mxu0 %v100
    %690 = vmatpush.msra.mxu0 %v99
    %691 = vmatpush.msra.mxu0 %v98
    %692 = vmatpush.msra.mxu0 %v97
    %693 = vmatmul.f32.gmra.mxu0 %v675
    %v694 = vpop.f32.mrf.mxu0
    %v695 = vadd.f32 %v101, %v694
    %696 = vdwg.mxu0
    %v697 = vadd.f32 %v237, %v695
    %v698 = vxor.u32 %v697, 2147483648
    %v699 = vmul.f32 %v698, 1.442695
    %v700 = vpow.pop %v699
    %v701 = vadd.f32 %v700, 1.0
    %v702 = vrcp.pop %v701
    %v703 = vmul.f32 %v701, %v702
    %v704 = vsub.f32 1.0, %v703
    %v705 = vmul.f32 %v702, %v704
    %v706 = vadd.f32 %v702, %v705
    %vm707 = vweird.f32 %v701
    %vm708 = vweird.f32 %v702
    %vm709 = vmor %vm707, %vm708
    %v710 = vsel %vm709, %v702, %v706
    %v711 = vand.u32 2147483647, %v701
    %vm712 = vcmp.eq.f32.partialorder %v711, 8.507059e+37
    %v713 = vand.u32 %v701, 2147483648
    %v714 = vor.u32 1.1754944e-38, %v713
    %v715 = vsel %vm712, %v714, %v710
    %v716 = vmul.f32 1.0, %v715
    %718 = vrot.lane.b32.xlu0 %v695, 64
    %v719 = vpop.permute.xlu0 %718
    %v721 = vmul.f32 %v716, %v719
    %723 = vrot.lane.b32.xlu0 %v721, 64
    %v724 = vpop.permute.xlu0 %723
    %v726 = vadd.f32 %v237, %v724
    %v727 = vtanh.pop %v726
    %v728 = vsub.f32 %v668, %v727
    %730 = vrot.lane.b32.xlu0 %v728, 96
    %v731 = vpop.permute.xlu0 %730
    %v733 = vmul.f32 %v716, %v731
    %735 = vrot.lane.b32.xlu0 %v733, 32
    %v736 = vpop.permute.xlu0 %735
    %v738 = vadd.f32 %v727, %v736
    %740 = vrot.lane.b32.xlu0 %v738, 64
    %v741 = vpop.permute.xlu0 %740
    %743 = vst.msk [vmem:[#allocation2 + $0xc] sm:$0x3] %vm321, %v741
    %744 = vst.msk [vmem:[#allocation2 + $0x2] sm:$0x3] %vm323, %v741
    %v745 = vsel %vm247, %v741, 0
    %747 = vmatpush.msra.mxu0 0.0
    %748 = vmatpush.msra.mxu0 0.0
    %749 = vmatpush.msra.mxu0 0.0
    %750 = vmatpush.msra.mxu0 0.0
    %751 = vmatpush.msra.mxu0 0.0
    %752 = vmatpush.msra.mxu0 0.0
    %753 = vmatpush.msra.mxu0 0.0
    %754 = vmatpush.msra.mxu0 0.0
    %755 = vmatpush.msra.mxu0 0.0
    %756 = vmatpush.msra.mxu0 0.0
    %757 = vmatpush.msra.mxu0 0.0
    %758 = vmatpush.msra.mxu0 0.0
    %759 = vmatpush.msra.mxu0 %v100
    %760 = vmatpush.msra.mxu0 %v99
    %761 = vmatpush.msra.mxu0 %v98
    %762 = vmatpush.msra.mxu0 %v97
    %763 = vmatmul.f32.gmra.mxu0 %v745
    %v764 = vpop.f32.mrf.mxu0
    %v765 = vadd.f32 %v101, %v764
    %766 = vdwg.mxu0
    %v767 = vadd.f32 %v246, %v765
    %v768 = vxor.u32 %v767, 2147483648
    %v769 = vmul.f32 %v768, 1.442695
    %v770 = vpow.pop %v769
    %v771 = vadd.f32 %v770, 1.0
    %v772 = vrcp.pop %v771
    %v773 = vmul.f32 %v771, %v772
    %v774 = vsub.f32 1.0, %v773
    %v775 = vmul.f32 %v772, %v774
    %v776 = vadd.f32 %v772, %v775
    %vm777 = vweird.f32 %v771
    %vm778 = vweird.f32 %v772
    %vm779 = vmor %vm777, %vm778
    %v780 = vsel %vm779, %v772, %v776
    %v781 = vand.u32 2147483647, %v771
    %vm782 = vcmp.eq.f32.partialorder %v781, 8.507059e+37
    %v783 = vand.u32 %v771, 2147483648
    %v784 = vor.u32 1.1754944e-38, %v783
    %v785 = vsel %vm782, %v784, %v780
    %v786 = vmul.f32 1.0, %v785
    %788 = vrot.lane.b32.xlu0 %v765, 64
    %v789 = vpop.permute.xlu0 %788
    %v791 = vmul.f32 %v786, %v789
    %793 = vrot.lane.b32.xlu0 %v791, 64
    %v794 = vpop.permute.xlu0 %793
    %v796 = vadd.f32 %v246, %v794
    %v797 = vtanh.pop %v796
    %v798 = vsub.f32 %v738, %v797
    %800 = vrot.lane.b32.xlu0 %v798, 96
    %v801 = vpop.permute.xlu0 %800
    %v803 = vmul.f32 %v786, %v801
    %805 = vrot.lane.b32.xlu0 %v803, 32
    %v806 = vpop.permute.xlu0 %805
    %v808 = vadd.f32 %v797, %v806
    %810 = vrot.lane.b32.xlu0 %v808, 64
    %v811 = vpop.permute.xlu0 %810
    %813 = vst.msk [vmem:[#allocation2 + $0xe] sm:$0x3] %vm321, %v811
    %814 = vst.msk [vmem:[#allocation2] sm:$0x3] %vm323, %v811
    %v815 = vld [vmem:[#allocation8 + $0x130] sm:$0xff]
    %v816 = vld [vmem:[#allocation8 + $0x138] sm:$0xff]
    %v817 = vld [vmem:[#allocation8 + $0x140] sm:$0xff]
    %v818 = vld [vmem:[#allocation8 + $0x148] sm:$0xff]
    %v819 = vld [vmem:[#allocation8 + $0x150] sm:$0xff]
    %v820 = vld [vmem:[#allocation8 + $0x158] sm:$0xff]
    %v821 = vld [vmem:[#allocation8 + $0x160] sm:$0xff]
    %v822 = vld [vmem:[#allocation8 + $0x168] sm:$0xff]
    %s823 = scalar_lea.vmem [#allocation8], 368
    %v824 = vld [vmem:[%s823] ss:$8 sm:$0x3]
    %v825 = vld [vmem:[#allocation8 + $0x180] sm:$0xff]
    %v826 = vld [vmem:[#allocation8 + $0x190] sm:$0xff]
    %v827 = vld [vmem:[#allocation8 + $0x1a0] sm:$0xff]
    %v828 = vld [vmem:[#allocation8 + $0x1b0] sm:$0xff]
    %v829 = vld [vmem:[#allocation8 + $0x1c0] ss:$0 sm:$0xff]
    %v830 = vld [vmem:[#allocation2] sm:$0xff]
    %v831 = vld [vmem:[#allocation2 + $0x8] sm:$0xff]
    %v833 = vperm.slane %v824, 0
    %v834 = vperm.slane %v824, 1
    %v838 = vsel %vm247, %v830, 0
    %v841 = vsel %vm247, %v831, 0
    %843 = vmatpush.msra.mxu0 0.0
    %844 = vmatpush.msra.mxu0 0.0
    %845 = vmatpush.msra.mxu0 0.0
    %846 = vmatpush.msra.mxu0 0.0
    %847 = vmatpush.msra.mxu0 0.0
    %848 = vmatpush.msra.mxu0 0.0
    %849 = vmatpush.msra.mxu0 0.0
    %850 = vmatpush.msra.mxu0 0.0
    %851 = vmatpush.msra.mxu0 0.0
    %852 = vmatpush.msra.mxu0 0.0
    %853 = vmatpush.msra.mxu0 0.0
    %854 = vmatpush.msra.mxu0 0.0
    %855 = vmatpush.msra.mxu0 %v821
    %856 = vmatpush.msra.mxu0 %v819
    %857 = vmatpush.msra.mxu0 %v817
    %858 = vmatpush.msra.mxu0 %v815
    %859 = vmatmul.f32.gmra.mxu0 %v838
    %v860 = vpop.f32.mrf.mxu0
    %v861 = vadd.f32 %v833, %v860
    %862 = vmatmul.f32.gmra.mxu0 %v841
    %v863 = vpop.f32.mrf.mxu0
    %v864 = vadd.f32 %v833, %v863
    %865 = vdwg.mxu0
    %866 = vmatpush.msra.mxu0 0.0
    %867 = vmatpush.msra.mxu0 0.0
    %868 = vmatpush.msra.mxu0 0.0
    %869 = vmatpush.msra.mxu0 0.0
    %870 = vmatpush.msra.mxu0 0.0
    %871 = vmatpush.msra.mxu0 0.0
    %872 = vmatpush.msra.mxu0 0.0
    %873 = vmatpush.msra.mxu0 0.0
    %874 = vmatpush.msra.mxu0 0.0
    %875 = vmatpush.msra.mxu0 0.0
    %876 = vmatpush.msra.mxu0 0.0
    %877 = vmatpush.msra.mxu0 0.0
    %878 = vmatpush.msra.mxu0 %v822
    %879 = vmatpush.msra.mxu0 %v820
    %880 = vmatpush.msra.mxu0 %v818
    %881 = vmatpush.msra.mxu0 %v816
    %882 = vmatmul.f32.gmra.mxu0 %v838
    %v883 = vpop.f32.mrf.mxu0
    %v884 = vadd.f32 %v834, %v883
    %885 = vmatmul.f32.gmra.mxu0 %v841
    %v886 = vpop.f32.mrf.mxu0
    %v887 = vadd.f32 %v834, %v886
    %888 = vdwg.mxu0
    %v890 = vrot.slane %v887, 6
    %v892 = vadd.f32 %v861, %v890
    %v893 = vrot.slane %v887, 2
    %v895 = vadd.f32 %v861, %v893
    %v897 = vrot.slane %v884, 6
    %v899 = vadd.f32 %v864, %v897
    %v900 = vrot.slane %v884, 2
    %v902 = vadd.f32 %v864, %v900
    %903 = vrot.lane.b32.xlu0 %v92, 96
    %v904 = vpop.permute.xlu0 %903
    %v905 = vsel %vm247, %v904, 0
    %907 = vmatpush.msra.mxu0 0.0
    %908 = vmatpush.msra.mxu0 0.0
    %909 = vmatpush.msra.mxu0 0.0
    %910 = vmatpush.msra.mxu0 0.0
    %911 = vmatpush.msra.mxu0 0.0
    %912 = vmatpush.msra.mxu0 0.0
    %913 = vmatpush.msra.mxu0 0.0
    %914 = vmatpush.msra.mxu0 0.0
    %915 = vmatpush.msra.mxu0 0.0
    %916 = vmatpush.msra.mxu0 0.0
    %917 = vmatpush.msra.mxu0 0.0
    %918 = vmatpush.msra.mxu0 0.0
    %919 = vmatpush.msra.mxu0 %v828
    %920 = vmatpush.msra.mxu0 %v827
    %921 = vmatpush.msra.mxu0 %v826
    %922 = vmatpush.msra.mxu0 %v825
    %923 = vmatmul.f32.gmra.mxu0 %v905
    %v924 = vpop.f32.mrf.mxu0
    %v925 = vadd.f32 %v829, %v924
    %926 = vdwg.mxu0
    %v927 = vadd.f32 %v892, %v925
    %v928 = vxor.u32 %v927, 2147483648
    %v929 = vmul.f32 %v928, 1.442695
    %v930 = vpow.pop %v929
    %v931 = vadd.f32 %v930, 1.0
    %v932 = vrcp.pop %v931
    %v933 = vmul.f32 %v931, %v932
    %v934 = vsub.f32 1.0, %v933
    %v935 = vmul.f32 %v932, %v934
    %v936 = vadd.f32 %v932, %v935
    %vm937 = vweird.f32 %v931
    %vm938 = vweird.f32 %v932
    %vm939 = vmor %vm937, %vm938
    %v940 = vsel %vm939, %v932, %v936
    %v941 = vand.u32 2147483647, %v931
    %vm942 = vcmp.eq.f32.partialorder %v941, 8.507059e+37
    %v943 = vand.u32 %v931, 2147483648
    %v944 = vor.u32 1.1754944e-38, %v943
    %v945 = vsel %vm942, %v944, %v940
    %v946 = vmul.f32 1.0, %v945
    %948 = vrot.lane.b32.xlu0 %v925, 64
    %v949 = vpop.permute.xlu0 %948
    %v951 = vmul.f32 %v946, %v949
    %953 = vrot.lane.b32.xlu0 %v951, 64
    %v954 = vpop.permute.xlu0 %953
    %v956 = vadd.f32 %v892, %v954
    %v957 = vtanh.pop %v956
    %959 = vrot.lane.b32.xlu0 %v957, 96
    %v960 = vpop.permute.xlu0 %959
    %v962 = vsub.f32 %v92, %v960
    %v963 = vmul.f32 %v946, %v962
    %965 = vrot.lane.b32.xlu0 %v963, 32
    %v966 = vpop.permute.xlu0 %965
    %v968 = vadd.f32 %v957, %v966
    %970 = vrot.lane.b32.xlu0 %v968, 64
    %v971 = vpop.permute.xlu0 %970
    %v972 = vsel %vm247, %v971, 0
    %974 = vmatpush.msra.mxu0 0.0
    %975 = vmatpush.msra.mxu0 0.0
    %976 = vmatpush.msra.mxu0 0.0
    %977 = vmatpush.msra.mxu0 0.0
    %978 = vmatpush.msra.mxu0 0.0
    %979 = vmatpush.msra.mxu0 0.0
    %980 = vmatpush.msra.mxu0 0.0
    %981 = vmatpush.msra.mxu0 0.0
    %982 = vmatpush.msra.mxu0 0.0
    %983 = vmatpush.msra.mxu0 0.0
    %984 = vmatpush.msra.mxu0 0.0
    %985 = vmatpush.msra.mxu0 0.0
    %986 = vmatpush.msra.mxu0 %v828
    %987 = vmatpush.msra.mxu0 %v827
    %988 = vmatpush.msra.mxu0 %v826
    %989 = vmatpush.msra.mxu0 %v825
    %990 = vmatmul.f32.gmra.mxu0 %v972
    %v991 = vpop.f32.mrf.mxu0
    %v992 = vadd.f32 %v829, %v991
    %993 = vdwg.mxu0
    %v995 = vrot.slane %v992, 6
    %v997 = vadd.f32 %v895, %v995
    %v998 = vxor.u32 %v997, 2147483648
    %v999 = vmul.f32 %v998, 1.442695
    %v1000 = vpow.pop %v999
    %v1001 = vadd.f32 %v1000, 1.0
    %v1002 = vrcp.pop %v1001
    %v1003 = vmul.f32 %v1001, %v1002
    %v1004 = vsub.f32 1.0, %v1003
    %v1005 = vmul.f32 %v1002, %v1004
    %v1006 = vadd.f32 %v1002, %v1005
    %vm1007 = vweird.f32 %v1001
    %vm1008 = vweird.f32 %v1002
    %vm1009 = vmor %vm1007, %vm1008
    %v1010 = vsel %vm1009, %v1002, %v1006
    %v1011 = vand.u32 2147483647, %v1001
    %vm1012 = vcmp.eq.f32.partialorder %v1011, 8.507059e+37
    %v1013 = vand.u32 %v1001, 2147483648
    %v1014 = vor.u32 1.1754944e-38, %v1013
    %v1015 = vsel %vm1012, %v1014, %v1010
    %v1016 = vmul.f32 1.0, %v1015
    %1017 = vrot.lane.b32.xlu0 %v995, 64
    %v1018 = vpop.permute.xlu0 %1017
    %v1020 = vmul.f32 %v1016, %v1018
    %1022 = vrot.lane.b32.xlu0 %v1020, 64
    %v1023 = vpop.permute.xlu0 %1022
    %v1025 = vadd.f32 %v895, %v1023
    %v1026 = vtanh.pop %v1025
    %v1028 = vrot.slane %v1026, 2
    %v1030 = vsub.f32 %v968, %v1028
    %v1032 = vrot.slane %v1030, 6
    %1033 = vrot.lane.b32.xlu0 %v1032, 96
    %v1034 = vpop.permute.xlu0 %1033
    %v1036 = vmul.f32 %v1016, %v1034
    %1038 = vrot.lane.b32.xlu0 %v1036, 32
    %v1039 = vpop.permute.xlu0 %1038
    %v1041 = vadd.f32 %v1026, %v1039
    %v1043 = vrot.slane %v1041, 2
    %1044 = vrot.lane.b32.xlu0 %v1043, 64
    %v1045 = vpop.permute.xlu0 %1044
    %v1046 = vsel %vm247, %v1045, 0
    %1048 = vmatpush.msra.mxu0 0.0
    %1049 = vmatpush.msra.mxu0 0.0
    %1050 = vmatpush.msra.mxu0 0.0
    %1051 = vmatpush.msra.mxu0 0.0
    %1052 = vmatpush.msra.mxu0 0.0
    %1053 = vmatpush.msra.mxu0 0.0
    %1054 = vmatpush.msra.mxu0 0.0
    %1055 = vmatpush.msra.mxu0 0.0
    %1056 = vmatpush.msra.mxu0 0.0
    %1057 = vmatpush.msra.mxu0 0.0
    %1058 = vmatpush.msra.mxu0 0.0
    %1059 = vmatpush.msra.mxu0 0.0
    %1060 = vmatpush.msra.mxu0 %v828
    %1061 = vmatpush.msra.mxu0 %v827
    %1062 = vmatpush.msra.mxu0 %v826
    %1063 = vmatpush.msra.mxu0 %v825
    %1064 = vmatmul.f32.gmra.mxu0 %v1046
    %v1065 = vpop.f32.mrf.mxu0
    %v1066 = vadd.f32 %v829, %v1065
    %1067 = vdwg.mxu0
    %v1069 = vrot.slane %v1066, 4
    %v1071 = vadd.f32 %v892, %v1069
    %v1072 = vxor.u32 %v1071, 2147483648
    %v1073 = vmul.f32 %v1072, 1.442695
    %v1074 = vpow.pop %v1073
    %v1075 = vadd.f32 %v1074, 1.0
    %v1076 = vrcp.pop %v1075
    %v1077 = vmul.f32 %v1075, %v1076
    %v1078 = vsub.f32 1.0, %v1077
    %v1079 = vmul.f32 %v1076, %v1078
    %v1080 = vadd.f32 %v1076, %v1079
    %vm1081 = vweird.f32 %v1075
    %vm1082 = vweird.f32 %v1076
    %vm1083 = vmor %vm1081, %vm1082
    %v1084 = vsel %vm1083, %v1076, %v1080
    %v1085 = vand.u32 2147483647, %v1075
    %vm1086 = vcmp.eq.f32.partialorder %v1085, 8.507059e+37
    %v1087 = vand.u32 %v1075, 2147483648
    %v1088 = vor.u32 1.1754944e-38, %v1087
    %v1089 = vsel %vm1086, %v1088, %v1084
    %v1090 = vmul.f32 1.0, %v1089
    %1091 = vrot.lane.b32.xlu0 %v1069, 64
    %v1092 = vpop.permute.xlu0 %1091
    %v1094 = vmul.f32 %v1090, %v1092
    %1096 = vrot.lane.b32.xlu0 %v1094, 64
    %v1097 = vpop.permute.xlu0 %1096
    %v1099 = vadd.f32 %v892, %v1097
    %v1100 = vtanh.pop %v1099
    %v1102 = vrot.slane %v1100, 2
    %v1104 = vsub.f32 %v1041, %v1102
    %v1106 = vrot.slane %v1104, 6
    %1107 = vrot.lane.b32.xlu0 %v1106, 96
    %v1108 = vpop.permute.xlu0 %1107
    %v1110 = vmul.f32 %v1090, %v1108
    %1112 = vrot.lane.b32.xlu0 %v1110, 32
    %v1113 = vpop.permute.xlu0 %1112
    %v1115 = vadd.f32 %v1100, %v1113
    %v1117 = vrot.slane %v1115, 4
    %1118 = vrot.lane.b32.xlu0 %v1117, 64
    %v1119 = vpop.permute.xlu0 %1118
    %v1120 = vsel %vm247, %v1119, 0
    %1122 = vmatpush.msra.mxu0 0.0
    %1123 = vmatpush.msra.mxu0 0.0
    %1124 = vmatpush.msra.mxu0 0.0
    %1125 = vmatpush.msra.mxu0 0.0
    %1126 = vmatpush.msra.mxu0 0.0
    %1127 = vmatpush.msra.mxu0 0.0
    %1128 = vmatpush.msra.mxu0 0.0
    %1129 = vmatpush.msra.mxu0 0.0
    %1130 = vmatpush.msra.mxu0 0.0
    %1131 = vmatpush.msra.mxu0 0.0
    %1132 = vmatpush.msra.mxu0 0.0
    %1133 = vmatpush.msra.mxu0 0.0
    %1134 = vmatpush.msra.mxu0 %v828
    %1135 = vmatpush.msra.mxu0 %v827
    %1136 = vmatpush.msra.mxu0 %v826
    %1137 = vmatpush.msra.mxu0 %v825
    %1138 = vmatmul.f32.gmra.mxu0 %v1120
    %v1139 = vpop.f32.mrf.mxu0
    %v1140 = vadd.f32 %v829, %v1139
    %1141 = vdwg.mxu0
    %v1143 = vrot.slane %v1140, 2
    %v1145 = vadd.f32 %v895, %v1143
    %v1146 = vxor.u32 %v1145, 2147483648
    %v1147 = vmul.f32 %v1146, 1.442695
    %v1148 = vpow.pop %v1147
    %v1149 = vadd.f32 %v1148, 1.0
    %v1150 = vrcp.pop %v1149
    %v1151 = vmul.f32 %v1149, %v1150
    %v1152 = vsub.f32 1.0, %v1151
    %v1153 = vmul.f32 %v1150, %v1152
    %v1154 = vadd.f32 %v1150, %v1153
    %vm1155 = vweird.f32 %v1149
    %vm1156 = vweird.f32 %v1150
    %vm1157 = vmor %vm1155, %vm1156
    %v1158 = vsel %vm1157, %v1150, %v1154
    %v1159 = vand.u32 2147483647, %v1149
    %vm1160 = vcmp.eq.f32.partialorder %v1159, 8.507059e+37
    %v1161 = vand.u32 %v1149, 2147483648
    %v1162 = vor.u32 1.1754944e-38, %v1161
    %v1163 = vsel %vm1160, %v1162, %v1158
    %v1164 = vmul.f32 1.0, %v1163
    %1165 = vrot.lane.b32.xlu0 %v1143, 64
    %v1166 = vpop.permute.xlu0 %1165
    %v1168 = vmul.f32 %v1164, %v1166
    %1170 = vrot.lane.b32.xlu0 %v1168, 64
    %v1171 = vpop.permute.xlu0 %1170
    %v1173 = vadd.f32 %v895, %v1171
    %v1174 = vtanh.pop %v1173
    %v1176 = vrot.slane %v1174, 2
    %v1178 = vsub.f32 %v1115, %v1176
    %v1180 = vrot.slane %v1178, 6
    %1181 = vrot.lane.b32.xlu0 %v1180, 96
    %v1182 = vpop.permute.xlu0 %1181
    %v1184 = vmul.f32 %v1164, %v1182
    %1186 = vrot.lane.b32.xlu0 %v1184, 32
    %v1187 = vpop.permute.xlu0 %1186
    %v1189 = vadd.f32 %v1174, %v1187
    %v1191 = vrot.slane %v1189, 6
    %1192 = vrot.lane.b32.xlu0 %v1191, 64
    %v1193 = vpop.permute.xlu0 %1192
    %v1194 = vsel %vm247, %v1193, 0
    %1196 = vmatpush.msra.mxu0 0.0
    %1197 = vmatpush.msra.mxu0 0.0
    %1198 = vmatpush.msra.mxu0 0.0
    %1199 = vmatpush.msra.mxu0 0.0
    %1200 = vmatpush.msra.mxu0 0.0
    %1201 = vmatpush.msra.mxu0 0.0
    %1202 = vmatpush.msra.mxu0 0.0
    %1203 = vmatpush.msra.mxu0 0.0
    %1204 = vmatpush.msra.mxu0 0.0
    %1205 = vmatpush.msra.mxu0 0.0
    %1206 = vmatpush.msra.mxu0 0.0
    %1207 = vmatpush.msra.mxu0 0.0
    %1208 = vmatpush.msra.mxu0 %v828
    %1209 = vmatpush.msra.mxu0 %v827
    %1210 = vmatpush.msra.mxu0 %v826
    %1211 = vmatpush.msra.mxu0 %v825
    %1212 = vmatmul.f32.gmra.mxu0 %v1194
    %v1213 = vpop.f32.mrf.mxu0
    %v1214 = vadd.f32 %v829, %v1213
    %1215 = vdwg.mxu0
    %v1216 = vadd.f32 %v899, %v1214
    %v1217 = vxor.u32 %v1216, 2147483648
    %v1218 = vmul.f32 %v1217, 1.442695
    %v1219 = vpow.pop %v1218
    %v1220 = vadd.f32 %v1219, 1.0
    %v1221 = vrcp.pop %v1220
    %v1222 = vmul.f32 %v1220, %v1221
    %v1223 = vsub.f32 1.0, %v1222
    %v1224 = vmul.f32 %v1221, %v1223
    %v1225 = vadd.f32 %v1221, %v1224
    %vm1226 = vweird.f32 %v1220
    %vm1227 = vweird.f32 %v1221
    %vm1228 = vmor %vm1226, %vm1227
    %v1229 = vsel %vm1228, %v1221, %v1225
    %v1230 = vand.u32 2147483647, %v1220
    %vm1231 = vcmp.eq.f32.partialorder %v1230, 8.507059e+37
    %v1232 = vand.u32 %v1220, 2147483648
    %v1233 = vor.u32 1.1754944e-38, %v1232
    %v1234 = vsel %vm1231, %v1233, %v1229
    %v1235 = vmul.f32 1.0, %v1234
    %1237 = vrot.lane.b32.xlu0 %v1214, 64
    %v1238 = vpop.permute.xlu0 %1237
    %v1240 = vmul.f32 %v1235, %v1238
    %1242 = vrot.lane.b32.xlu0 %v1240, 64
    %v1243 = vpop.permute.xlu0 %1242
    %v1245 = vadd.f32 %v899, %v1243
    %v1246 = vtanh.pop %v1245
    %v1248 = vrot.slane %v1246, 2
    %v1250 = vsub.f32 %v1189, %v1248
    %v1252 = vrot.slane %v1250, 6
    %1253 = vrot.lane.b32.xlu0 %v1252, 96
    %v1254 = vpop.permute.xlu0 %1253
    %v1256 = vmul.f32 %v1235, %v1254
    %1258 = vrot.lane.b32.xlu0 %v1256, 32
    %v1259 = vpop.permute.xlu0 %1258
    %v1261 = vadd.f32 %v1246, %v1259
    %1263 = vrot.lane.b32.xlu0 %v1261, 64
    %v1264 = vpop.permute.xlu0 %1263
    %v1265 = vsel %vm247, %v1264, 0
    %1267 = vmatpush.msra.mxu0 0.0
    %1268 = vmatpush.msra.mxu0 0.0
    %1269 = vmatpush.msra.mxu0 0.0
    %1270 = vmatpush.msra.mxu0 0.0
    %1271 = vmatpush.msra.mxu0 0.0
    %1272 = vmatpush.msra.mxu0 0.0
    %1273 = vmatpush.msra.mxu0 0.0
    %1274 = vmatpush.msra.mxu0 0.0
    %1275 = vmatpush.msra.mxu0 0.0
    %1276 = vmatpush.msra.mxu0 0.0
    %1277 = vmatpush.msra.mxu0 0.0
    %1278 = vmatpush.msra.mxu0 0.0
    %1279 = vmatpush.msra.mxu0 %v828
    %1280 = vmatpush.msra.mxu0 %v827
    %1281 = vmatpush.msra.mxu0 %v826
    %1282 = vmatpush.msra.mxu0 %v825
    %1283 = vmatmul.f32.gmra.mxu0 %v1265
    %v1284 = vpop.f32.mrf.mxu0
    %v1285 = vadd.f32 %v829, %v1284
    %1286 = vdwg.mxu0
    %v1288 = vrot.slane %v1285, 6
    %v1290 = vadd.f32 %v902, %v1288
    %v1291 = vxor.u32 %v1290, 2147483648
    %v1292 = vmul.f32 %v1291, 1.442695
    %v1293 = vpow.pop %v1292
    %v1294 = vadd.f32 %v1293, 1.0
    %v1295 = vrcp.pop %v1294
    %v1296 = vmul.f32 %v1294, %v1295
    %v1297 = vsub.f32 1.0, %v1296
    %v1298 = vmul.f32 %v1295, %v1297
    %v1299 = vadd.f32 %v1295, %v1298
    %vm1300 = vweird.f32 %v1294
    %vm1301 = vweird.f32 %v1295
    %vm1302 = vmor %vm1300, %vm1301
    %v1303 = vsel %vm1302, %v1295, %v1299
    %v1304 = vand.u32 2147483647, %v1294
    %vm1305 = vcmp.eq.f32.partialorder %v1304, 8.507059e+37
    %v1306 = vand.u32 %v1294, 2147483648
    %v1307 = vor.u32 1.1754944e-38, %v1306
    %v1308 = vsel %vm1305, %v1307, %v1303
    %v1309 = vmul.f32 1.0, %v1308
    %1310 = vrot.lane.b32.xlu0 %v1288, 64
    %v1311 = vpop.permute.xlu0 %1310
    %v1313 = vmul.f32 %v1309, %v1311
    %1315 = vrot.lane.b32.xlu0 %v1313, 64
    %v1316 = vpop.permute.xlu0 %1315
    %v1318 = vadd.f32 %v902, %v1316
    %v1319 = vtanh.pop %v1318
    %v1321 = vrot.slane %v1319, 2
    %v1323 = vsub.f32 %v1261, %v1321
    %v1325 = vrot.slane %v1323, 6
    %1326 = vrot.lane.b32.xlu0 %v1325, 96
    %v1327 = vpop.permute.xlu0 %1326
    %v1329 = vmul.f32 %v1309, %v1327
    %1331 = vrot.lane.b32.xlu0 %v1329, 32
    %v1332 = vpop.permute.xlu0 %1331
    %v1334 = vadd.f32 %v1319, %v1332
    %v1336 = vrot.slane %v1334, 2
    %1337 = vrot.lane.b32.xlu0 %v1336, 64
    %v1338 = vpop.permute.xlu0 %1337
    %v1339 = vsel %vm247, %v1338, 0
    %1341 = vmatpush.msra.mxu0 0.0
    %1342 = vmatpush.msra.mxu0 0.0
    %1343 = vmatpush.msra.mxu0 0.0
    %1344 = vmatpush.msra.mxu0 0.0
    %1345 = vmatpush.msra.mxu0 0.0
    %1346 = vmatpush.msra.mxu0 0.0
    %1347 = vmatpush.msra.mxu0 0.0
    %1348 = vmatpush.msra.mxu0 0.0
    %1349 = vmatpush.msra.mxu0 0.0
    %1350 = vmatpush.msra.mxu0 0.0
    %1351 = vmatpush.msra.mxu0 0.0
    %1352 = vmatpush.msra.mxu0 0.0
    %1353 = vmatpush.msra.mxu0 %v828
    %1354 = vmatpush.msra.mxu0 %v827
    %1355 = vmatpush.msra.mxu0 %v826
    %1356 = vmatpush.msra.mxu0 %v825
    %1357 = vmatmul.f32.gmra.mxu0 %v1339
    %v1358 = vpop.f32.mrf.mxu0
    %v1359 = vadd.f32 %v829, %v1358
    %1360 = vdwg.mxu0
    %v1362 = vrot.slane %v1359, 4
    %v1364 = vadd.f32 %v899, %v1362
    %v1365 = vxor.u32 %v1364, 2147483648
    %v1366 = vmul.f32 %v1365, 1.442695
    %v1367 = vpow.pop %v1366
    %v1368 = vadd.f32 %v1367, 1.0
    %v1369 = vrcp.pop %v1368
    %v1370 = vmul.f32 %v1368, %v1369
    %v1371 = vsub.f32 1.0, %v1370
    %v1372 = vmul.f32 %v1369, %v1371
    %v1373 = vadd.f32 %v1369, %v1372
    %vm1374 = vweird.f32 %v1368
    %vm1375 = vweird.f32 %v1369
    %vm1376 = vmor %vm1374, %vm1375
    %v1377 = vsel %vm1376, %v1369, %v1373
    %v1378 = vand.u32 2147483647, %v1368
    %vm1379 = vcmp.eq.f32.partialorder %v1378, 8.507059e+37
    %v1380 = vand.u32 %v1368, 2147483648
    %v1381 = vor.u32 1.1754944e-38, %v1380
    %v1382 = vsel %vm1379, %v1381, %v1377
    %v1383 = vmul.f32 1.0, %v1382
    %1384 = vrot.lane.b32.xlu0 %v1362, 64
    %v1385 = vpop.permute.xlu0 %1384
    %v1387 = vmul.f32 %v1383, %v1385
    %1389 = vrot.lane.b32.xlu0 %v1387, 64
    %v1390 = vpop.permute.xlu0 %1389
    %v1392 = vadd.f32 %v899, %v1390
    %v1393 = vtanh.pop %v1392
    %v1395 = vrot.slane %v1393, 2
    %v1397 = vsub.f32 %v1334, %v1395
    %v1399 = vrot.slane %v1397, 6
    %1400 = vrot.lane.b32.xlu0 %v1399, 96
    %v1401 = vpop.permute.xlu0 %1400
    %v1403 = vmul.f32 %v1383, %v1401
    %1405 = vrot.lane.b32.xlu0 %v1403, 32
    %v1406 = vpop.permute.xlu0 %1405
    %v1408 = vadd.f32 %v1393, %v1406
    %v1410 = vrot.slane %v1408, 4
    %1411 = vrot.lane.b32.xlu0 %v1410, 64
    %v1412 = vpop.permute.xlu0 %1411
    %v1413 = vsel %vm247, %v1412, 0
    %1415 = vmatpush.msra.mxu0 0.0
    %1416 = vmatpush.msra.mxu0 0.0
    %1417 = vmatpush.msra.mxu0 0.0
    %1418 = vmatpush.msra.mxu0 0.0
    %1419 = vmatpush.msra.mxu0 0.0
    %1420 = vmatpush.msra.mxu0 0.0
    %1421 = vmatpush.msra.mxu0 0.0
    %1422 = vmatpush.msra.mxu0 0.0
    %1423 = vmatpush.msra.mxu0 0.0
    %1424 = vmatpush.msra.mxu0 0.0
    %1425 = vmatpush.msra.mxu0 0.0
    %1426 = vmatpush.msra.mxu0 0.0
    %1427 = vmatpush.msra.mxu0 %v828
    %1428 = vmatpush.msra.mxu0 %v827
    %1429 = vmatpush.msra.mxu0 %v826
    %1430 = vmatpush.msra.mxu0 %v825
    %1431 = vmatmul.f32.gmra.mxu0 %v1413
    %v1432 = vpop.f32.mrf.mxu0
    %v1433 = vadd.f32 %v829, %v1432
    %1434 = vdwg.mxu0
    %v1436 = vrot.slane %v1433, 2
    %v1438 = vadd.f32 %v902, %v1436
    %v1439 = vxor.u32 %v1438, 2147483648
    %v1440 = vmul.f32 %v1439, 1.442695
    %v1441 = vpow.pop %v1440
    %v1442 = vadd.f32 %v1441, 1.0
    %v1443 = vrcp.pop %v1442
    %v1444 = vmul.f32 %v1442, %v1443
    %v1445 = vsub.f32 1.0, %v1444
    %v1446 = vmul.f32 %v1443, %v1445
    %v1447 = vadd.f32 %v1443, %v1446
    %vm1448 = vweird.f32 %v1442
    %vm1449 = vweird.f32 %v1443
    %vm1450 = vmor %vm1448, %vm1449
    %v1451 = vsel %vm1450, %v1443, %v1447
    %v1452 = vand.u32 2147483647, %v1442
    %vm1453 = vcmp.eq.f32.partialorder %v1452, 8.507059e+37
    %v1454 = vand.u32 %v1442, 2147483648
    %v1455 = vor.u32 1.1754944e-38, %v1454
    %v1456 = vsel %vm1453, %v1455, %v1451
    %v1457 = vmul.f32 1.0, %v1456
    %1458 = vrot.lane.b32.xlu0 %v1436, 64
    %v1459 = vpop.permute.xlu0 %1458
    %v1461 = vmul.f32 %v1457, %v1459
    %1463 = vrot.lane.b32.xlu0 %v1461, 64
    %v1464 = vpop.permute.xlu0 %1463
    %v1466 = vadd.f32 %v902, %v1464
    %v1467 = vtanh.pop %v1466
    %v1469 = vrot.slane %v1467, 2
    %v1471 = vsub.f32 %v1408, %v1469
    %v1473 = vrot.slane %v1471, 6
    %1474 = vrot.lane.b32.xlu0 %v1473, 96
    %v1475 = vpop.permute.xlu0 %1474
    %v1477 = vmul.f32 %v1457, %v1475
    %1479 = vrot.lane.b32.xlu0 %v1477, 32
    %v1480 = vpop.permute.xlu0 %1479
    %v1482 = vadd.f32 %v1467, %v1480
    %v1484 = vrot.slane %v1482, 6
    %1485 = vrot.lane.b32.xlu0 %v1484, 96
    %v1486 = vpop.permute.xlu0 %1485
    %v1488 = vsel %vm247, %v811, %v1486
    %v1489 = vld [vmem:[#allocation8 + $0x30] sm:$0xff]
    %v1490 = vld [vmem:[#allocation8 + $0x40] sm:$0xff]
    %v1491 = vld [vmem:[#allocation8 + $0x50] sm:$0xff]
    %v1492 = vld [vmem:[#allocation8 + $0x60] sm:$0xff]
    %v1493 = vld [vmem:[#allocation8 + $0x70] sm:$0xff]
    %v1494 = vld [vmem:[#allocation8 + $0x80] sm:$0xff]
    %v1495 = vld [vmem:[#allocation8 + $0x90] sm:$0xff]
    %v1496 = vld [vmem:[#allocation8 + $0xa0] sm:$0xff]
    %v1497 = vld [vmem:[#allocation8 + $0xb0] ss:$0 sm:$0xff]
    %vm1498 = vcmask 523264
    %v1500 = vsel %vm1498, %v1488, 0
    %1502 = vmatpush.msra.mxu0 0.0
    %1503 = vmatpush.msra.mxu0 0.0
    %1504 = vmatpush.msra.mxu0 0.0
    %1505 = vmatpush.msra.mxu0 0.0
    %1506 = vmatpush.msra.mxu0 0.0
    %1507 = vmatpush.msra.mxu0 0.0
    %1508 = vmatpush.msra.mxu0 0.0
    %1509 = vmatpush.msra.mxu0 0.0
    %1510 = vmatpush.msra.mxu0 %v1496
    %1511 = vmatpush.msra.mxu0 %v1495
    %1512 = vmatpush.msra.mxu0 %v1494
    %1513 = vmatpush.msra.mxu0 %v1493
    %1514 = vmatpush.msra.mxu0 %v1492
    %1515 = vmatpush.msra.mxu0 %v1491
    %1516 = vmatpush.msra.mxu0 %v1490
    %1517 = vmatpush.msra.mxu0 %v1489
    %1518 = vmatmul.f32.gmra.mxu0 %v1500
    %v1519 = vpop.f32.mrf.mxu0
    %v1520 = vadd.f32 %v1497, %v1519
    %1521 = vdwg.mxu0
    %v1522 = vmax.f32 %v1520, 0.0
    %vm1523 = vcmask 254976
    %1524 = vst.msk [vmem:[#allocation9] sm:$0x3] %vm1523, %v1522
    // Predicated region
    $region26: #{_forward_impl.1} parent=1 // pred_check
      _
    $region27: #{_forward_impl.1} parent=1 // pred_check_branch
      %1526 = sbr.rel (0) target = $region29
    $region28: #{_forward_impl.1} parent=1 // pred_region
      %1528 = vsyncadd [#allocation5], 0
      %s1530 = sshll.u32 [#allocation9], 4
      %s1531 = int_to_ptr.vmem [resolvable:$true] %s1530
      %s1532 = sshll.u32 %s3, 4
      %s1533 = int_to_ptr.hbm [resolvable:$true] %s1532
      %1535 = dma.vmem_to_hbm [thread:$0]  %s1531, 32, %s1533, [#allocation5]
    $region29: #{_forward_impl.1} parent=1 // pred_fallthru
      _
    // Predicated region
    $region30: #{_forward_impl.1} parent=1 // pred_check
      _
    $region31: #{_forward_impl.1} parent=1 // pred_check_branch
      %1537 = sbr.rel (0) target = $region33
    $region32: #{_forward_impl.1} parent=1 // pred_region
      %1539 = dma.done [#allocation5], 32
    $region33: #{_forward_impl.1} parent=1 // pred_fallthru
      _
    %1540 = vsyncpa [#allocation4], 1
    %1541 = vsyncpa [#allocation7], 1
    %1542 = vsyncpa [#allocation5], 1

</llo_original>
